<compile_context>
chip_gen: v5e
topology: v5e:2x2
jax: 0.10.0
libtpu: 0.0.40
codegen_flags: <defaults>
</compile_context>

<pallas_src>
import jax
import jax.numpy as jnp
from jax.experimental import pallas as pl
from jax.experimental.pallas import tpu as pltpu

# ----------------------------- configuration --------------------------------
VOCAB      = 100
VOCAB_PAD  = 128          # pad vocab to 128 lanes for the one-hot embedding matmul
BATCH      = 2
SEQ        = 8
HIDDEN     = 64
N_HEADS    = 4
HEAD_DIM   = HIDDEN // N_HEADS
FFN        = 4 * HIDDEN
N_LAYERS   = 2
OUT_DIM    = 2
OUT_PAD    = 128          # lane-dense padded logits; sliced to OUT_DIM in wrapper
OUT_ROWS   = 8            # sublane-dense padded logits; sliced to BATCH in wrapper
LN_EPS     = 1e-12

BS = BATCH * SEQ                 # 16 token rows
R  = BATCH * N_HEADS * SEQ       # 64 replicated (batch, head, query) rows

# static cost estimate (matmul FLOPs; exp/gelu/rsqrt transcendentals)
_FLOPS = 4_546_560
_TRANSCENDENTALS = 16_384


# ------------------------------ Pallas kernel --------------------------------
def _layer_norm(x, g, b):
    # single-pass LN: E[x] and E[x^2] together, var = E[x^2] - mu^2  (f32)
    mu = jnp.mean(x, axis=-1, keepdims=True)
    ms = jnp.mean(x * x, axis=-1, keepdims=True)
    var = ms - mu * mu
    return (x - mu) * jax.lax.rsqrt(var + LN_EPS) * g + b


def model_kernel(ids_ref, mask_ref,
                 expand_ref, collapse_ref, cls_sel_ref, same_batch_ref, head_mask_ref,
                 pos_ref, tok_emb_ref, emb_ln_ref,
                 qkv_w_ref, qkv_b_ref, wo_w_ref, wo_b_ref, ln_ref,
                 w1_ref, b1_ref, w2_ref, b2_ref,
                 cw1_ref, cb1_ref, cw2_ref, cb2_ref, cw3_ref, cb3_ref,
                 out_ref):
    f32 = jnp.float32
    bf16 = jnp.bfloat16

    # ---- embeddings: one-hot gather matmul (bf16 MXU) + positions + LN ------
    ids = ids_ref[...]                                                  # (BS, 1) i32
    vocab_iota = jax.lax.broadcasted_iota(jnp.int32, (BS, VOCAB_PAD), 1)
    onehot = (vocab_iota == ids).astype(bf16)                           # (BS, VOCAB_PAD)
    x = jnp.dot(onehot, tok_emb_ref[...], preferred_element_type=f32)   # (BS, H) f32
    x = x + pos_ref[...]
    x = _layer_norm(x, emb_ln_ref[0], emb_ln_ref[1])

    # ---- host-precomputed constant select matrices ---------------------------
    expand = expand_ref[...]          # (R, BS)  bf16, replicate token rows per head
    collapse = collapse_ref[...]      # (BS, R)  bf16, fold heads back to token rows
    head_mask = head_mask_ref[...]    # (R, H)   f32, keep only this head's lanes
    # additive attention bias: 0 where (same batch AND key valid), -1e9 otherwise
    attend_bias = (same_batch_ref[...] * mask_ref[...] - 1.0) * f32(1e9)   # (R, BS)

    # ---- transformer layers --------------------------------------------------
    for l in range(N_LAYERS):
        xb = x.astype(bf16)
        # fused QKV: one (BS, H) x (H, 3H) matmul; 1/sqrt(dH) pre-folded into Wq/bq
        qkv = jnp.dot(xb, qkv_w_ref[l], preferred_element_type=f32) + qkv_b_ref[l]
        q = qkv[:, :HIDDEN]
        k = qkv[:, HIDDEN:2 * HIDDEN]
        v = qkv[:, 2 * HIDDEN:]

        # replicate queries per head along sublanes, keep only that head's lanes
        q_big = jnp.dot(expand, q.astype(bf16), preferred_element_type=f32) * head_mask

        # all (batch, head) score tiles in one matmul, contract over hidden dim
        scores = jax.lax.dot_general(q_big.astype(bf16), k.astype(bf16),
                                     (((1,), (1,)), ((), ())),
                                     preferred_element_type=f32)        # (R, BS)
        scores = scores + attend_bias

        m = jnp.max(scores, axis=-1, keepdims=True)
        e = jnp.exp(scores - m)
        denom = jnp.sum(e, axis=-1, keepdims=True)
        # TODO(synk): approx=True (EUP) adds ~1e-3 rel. error; use approx=False
        # when validating tightly against a PyTorch/XLA reference.
        probs = e * pl.reciprocal(denom, approx=True)                   # (R, BS) f32

        ctx_all = jnp.dot(probs.astype(bf16), v.astype(bf16),
                          preferred_element_type=f32) * head_mask       # (R, H)
        ctx = jnp.dot(collapse, ctx_all.astype(bf16),
                      preferred_element_type=f32)                       # (BS, H)

        attn_out = jnp.dot(ctx.astype(bf16), wo_w_ref[l],
                           preferred_element_type=f32) + wo_b_ref[l]
        y = _layer_norm(x + attn_out, ln_ref[l, 0], ln_ref[l, 1])

        h1 = jnp.dot(y.astype(bf16), w1_ref[l], preferred_element_type=f32) + b1_ref[l]
        # TODO(synk): PyTorch nn.GELU default is exact erf; tanh approximation used here.
        h1 = jax.nn.gelu(h1, approximate=True)
        h2 = jnp.dot(h1.astype(bf16), w2_ref[l], preferred_element_type=f32) + b2_ref[l]
        x = _layer_norm(y + h2, ln_ref[l, 2], ln_ref[l, 3])

    # ---- CLS pooling + classifier head (dropout = eval no-op) ---------------
    pooled = jnp.dot(cls_sel_ref[...], x.astype(bf16),
                     preferred_element_type=f32)                        # (8, H)
    h = jnp.dot(pooled.astype(bf16), cw1_ref[...], preferred_element_type=f32) + cb1_ref[...]
    h = jnp.maximum(h, 0.0)
    h = jnp.dot(h.astype(bf16), cw2_ref[...], preferred_element_type=f32) + cb2_ref[...]
    h = jnp.maximum(h, 0.0)
    # (8, 128) unmasked store; wrapper slices [:BATCH, :OUT_DIM]
    out_ref[...] = jnp.dot(h.astype(bf16), cw3_ref[...],
                           preferred_element_type=f32) + cb3_ref[...]


# ------------------------------ wrapper ---------------------------------------
def forward(input_ids, attention_mask, params, consts):
    ids = input_ids.astype(jnp.int32).reshape(BS, 1)
    maskf = attention_mask.astype(jnp.float32).reshape(1, BS)

    vmem = pl.BlockSpec(memory_space=pltpu.MemorySpace.VMEM)
    args = (ids, maskf,
            consts["expand"], consts["collapse"], consts["cls_sel"],
            consts["same_batch"], consts["head_lane_mask"],
            params["pos_emb"], params["tok_emb"], params["emb_ln"],
            params["qkv_w"], params["qkv_b"], params["wo_w"], params["wo_b"],
            params["ln"], params["w1"], params["b1"], params["w2"], params["b2"],
            params["cw1"], params["cb1"], params["cw2"], params["cb2"],
            params["cw3"], params["cb3"])

    bytes_accessed = sum(int(a.size) * a.dtype.itemsize for a in args) \
        + OUT_ROWS * OUT_PAD * 4

    logits_pad = pl.pallas_call(
        model_kernel,
        out_shape=jax.ShapeDtypeStruct((OUT_ROWS, OUT_PAD), jnp.float32),
        in_specs=[vmem] * len(args),
        out_specs=vmem,
        cost_estimate=pl.CostEstimate(flops=_FLOPS,
                                      transcendentals=_TRANSCENDENTALS,
                                      bytes_accessed=bytes_accessed),
    )(*args)
    return logits_pad[:BATCH, :OUT_DIM]


# ---------------------- host-precomputed constant matrices --------------------
def make_constants():
    f32, bf16 = jnp.float32, jnp.bfloat16
    r = jnp.arange(R)
    t = jnp.arange(BS)
    lane = jnp.arange(HIDDEN)
    h_of_r = (r // SEQ) % N_HEADS
    b_of_r = r // (N_HEADS * SEQ)
    s_of_r = r % SEQ

    head_lane_mask = (h_of_r[:, None] == (lane[None, :] // HEAD_DIM)).astype(f32)   # (R, H)
    expand = (t[None, :] == (b_of_r * SEQ + s_of_r)[:, None]).astype(bf16)          # (R, BS)
    same_batch = (b_of_r[:, None] == (t[None, :] // SEQ)).astype(f32)               # (R, BS)
    collapse = (((t[:, None] % SEQ) == s_of_r[None, :]) &
                ((t[:, None] // SEQ) == b_of_r[None, :])).astype(bf16)              # (BS, R)
    rows8 = jnp.arange(OUT_ROWS)
    cls_sel = ((rows8[:, None] < BATCH) &
               (t[None, :] == rows8[:, None] * SEQ)).astype(bf16)                   # (8, BS)

    return {"expand": expand, "collapse": collapse, "cls_sel": cls_sel,
            "same_batch": same_batch, "head_lane_mask": head_lane_mask}


# ------------------------------ parameter init --------------------------------
def init_params(key):
    std = 0.02
    keys = iter(jax.random.split(key, 64))
    f32, bf16 = jnp.float32, jnp.bfloat16

    def w(shape):
        return (std * jax.random.normal(next(keys), shape)).astype(f32)

    tok = jnp.zeros((VOCAB_PAD, HIDDEN), f32).at[:VOCAB].set(w((VOCAB, HIDDEN))).astype(bf16)
    pos = jnp.tile(w((SEQ, HIDDEN)), (BATCH, 1))                        # (BS, H) f32
    emb_ln = jnp.stack([jnp.ones((1, HIDDEN)), jnp.zeros((1, HIDDEN))]).astype(f32)

    scale = 1.0 / (HEAD_DIM ** 0.5)
    # fused (H, 3H) QKV weights; 1/sqrt(dH) folded into the Wq slice AND bq slice
    qkv_w = jnp.stack([
        jnp.concatenate([w((HIDDEN, HIDDEN)) * scale,      # Wq (pre-scaled)
                         w((HIDDEN, HIDDEN)),              # Wk
                         w((HIDDEN, HIDDEN))], axis=1)     # Wv
        for _ in range(N_LAYERS)]).astype(bf16)                          # (L, H, 3H)
    qkv_b = jnp.zeros((N_LAYERS, 1, 3 * HIDDEN), f32)
    qkv_b = qkv_b.at[:, :, :HIDDEN].multiply(scale)

    wo_w = jnp.stack([w((HIDDEN, HIDDEN)) for _ in range(N_LAYERS)]).astype(bf16)
    wo_b = jnp.zeros((N_LAYERS, 1, HIDDEN), f32)

    ln_one = jnp.stack([jnp.ones((1, HIDDEN)), jnp.zeros((1, HIDDEN)),
                        jnp.ones((1, HIDDEN)), jnp.zeros((1, HIDDEN))])  # (4, 1, H)
    ln = jnp.tile(ln_one[None], (N_LAYERS, 1, 1, 1)).astype(f32)

    w1 = jnp.stack([w((HIDDEN, FFN)) for _ in range(N_LAYERS)]).astype(bf16)
    b1 = jnp.zeros((N_LAYERS, 1, FFN), f32)
    w2 = jnp.stack([w((FFN, HIDDEN)) for _ in range(N_LAYERS)]).astype(bf16)
    b2 = jnp.zeros((N_LAYERS, 1, HIDDEN), f32)

    cw3 = jnp.zeros((HIDDEN // 4, OUT_PAD), f32).at[:, :OUT_DIM].set(
        w((HIDDEN // 4, OUT_DIM))).astype(bf16)

    return {
        "tok_emb": tok, "pos_emb": pos, "emb_ln": emb_ln,
        "qkv_w": qkv_w, "qkv_b": qkv_b, "wo_w": wo_w, "wo_b": wo_b, "ln": ln,
        "w1": w1, "b1": b1, "w2": w2, "b2": b2,
        "cw1": w((HIDDEN, HIDDEN // 2)).astype(bf16),
        "cb1": jnp.zeros((1, HIDDEN // 2), f32),
        "cw2": w((HIDDEN // 2, HIDDEN // 4)).astype(bf16),
        "cb2": jnp.zeros((1, HIDDEN // 4), f32),
        "cw3": cw3,
        "cb3": jnp.zeros((1, OUT_PAD), f32),
    }


# ---------------------------------- main --------------------------------------
if __name__ == "__main__":
    key = jax.random.PRNGKey(0)
    k_ids, k_params = jax.random.split(key)

    input_ids = jax.random.randint(k_ids, (BATCH, SEQ), 0, VOCAB, dtype=jnp.int32)
    attention_mask = jnp.ones((BATCH, SEQ), dtype=jnp.int32)
    attention_mask = attention_mask.at[1, 6:].set(0)   # padding on sample 1

    params = init_params(k_params)
    consts = make_constants()

    logits = jax.jit(forward)(input_ids, attention_mask, params, consts)
    logits = jax.block_until_ready(logits)
    assert logits.shape == (BATCH, OUT_DIM) and logits.dtype == jnp.float32
    assert bool(jnp.all(jnp.isfinite(logits)))

    print("KERNEL_OK")
</pallas_src>

<mosaic_0001>
module attributes {stable_mosaic.version = 11 : i64} {
  func.func @model_kernel(%arg0: memref<16x1xi32, #tpu.memory_space<vmem>>, %arg1: memref<1x16xf32, #tpu.memory_space<vmem>>, %arg2: memref<64x16xbf16, #tpu.memory_space<vmem>>, %arg3: memref<16x64xbf16, #tpu.memory_space<vmem>>, %arg4: memref<8x16xbf16, #tpu.memory_space<vmem>>, %arg5: memref<64x16xf32, #tpu.memory_space<vmem>>, %arg6: memref<64x64xf32, #tpu.memory_space<vmem>>, %arg7: memref<16x64xf32, #tpu.memory_space<vmem>>, %arg8: memref<128x64xbf16, #tpu.memory_space<vmem>>, %arg9: memref<2x1x64xf32, #tpu.memory_space<vmem>>, %arg10: memref<2x64x192xbf16, #tpu.memory_space<vmem>>, %arg11: memref<2x1x192xf32, #tpu.memory_space<vmem>>, %arg12: memref<2x64x64xbf16, #tpu.memory_space<vmem>>, %arg13: memref<2x1x64xf32, #tpu.memory_space<vmem>>, %arg14: memref<2x4x1x64xf32, #tpu.memory_space<vmem>>, %arg15: memref<2x64x256xbf16, #tpu.memory_space<vmem>>, %arg16: memref<2x1x256xf32, #tpu.memory_space<vmem>>, %arg17: memref<2x256x64xbf16, #tpu.memory_space<vmem>>, %arg18: memref<2x1x64xf32, #tpu.memory_space<vmem>>, %arg19: memref<64x32xbf16, #tpu.memory_space<vmem>>, %arg20: memref<1x32xf32, #tpu.memory_space<vmem>>, %arg21: memref<32x16xbf16, #tpu.memory_space<vmem>>, %arg22: memref<1x16xf32, #tpu.memory_space<vmem>>, %arg23: memref<16x128xbf16, #tpu.memory_space<vmem>>, %arg24: memref<1x128xf32, #tpu.memory_space<vmem>>, %arg25: memref<8x128xf32, #tpu.memory_space<vmem>>) attributes {dimension_semantics = [], scalar_prefetch = 0 : i64, scratch_operands = 0 : i64, tpu.core_type = #tpu.core_type<tc>} {
    %c0 = arith.constant 0 : index
    %c0_0 = arith.constant 0 : index
    %0 = vector.load %arg0[%c0, %c0_0] : memref<16x1xi32, #tpu.memory_space<vmem>>, vector<16x1xi32>
    %1 = tpu.iota {dimensions = array<i32: 1>} : vector<16x128xi32>
    %2 = vector.broadcast %0 : vector<16x1xi32> to vector<16x128xi32>
    %3 = arith.cmpi eq, %1, %2 : vector<16x128xi32>
    %4 = arith.extui %3 : vector<16x128xi1> to vector<16x128xi32>
    %5 = arith.sitofp %4 : vector<16x128xi32> to vector<16x128xf32>
    %6 = arith.truncf %5 : vector<16x128xf32> to vector<16x128xbf16>
    %c0_1 = arith.constant 0 : index
    %c0_2 = arith.constant 0 : index
    %7 = vector.load %arg8[%c0_1, %c0_2] : memref<128x64xbf16, #tpu.memory_space<vmem>>, vector<128x64xbf16>
    %cst = arith.constant dense<0.000000e+00> : vector<16x64xf32>
    %8 = tpu.matmul %6, %7, %cst {dimension_numbers = #tpu.dot_dimension_numbers<[1], [0], [0], [1], [0, 0, 1, 1], [], []>} : vector<16x128xbf16>, vector<128x64xbf16>, vector<16x64xf32> -> vector<16x64xf32>
    %c0_3 = arith.constant 0 : index
    %c0_4 = arith.constant 0 : index
    %9 = vector.load %arg7[%c0_3, %c0_4] : memref<16x64xf32, #tpu.memory_space<vmem>>, vector<16x64xf32>
    %10 = arith.addf %8, %9 : vector<16x64xf32>
    %c0_5 = arith.constant 0 : index
    %c0_6 = arith.constant 0 : index
    %c0_7 = arith.constant 0 : index
    %11 = vector.load %arg9[%c0_5, %c0_6, %c0_7] : memref<2x1x64xf32, #tpu.memory_space<vmem>>, vector<1x1x64xf32>
    %12 = vector.shape_cast %11 : vector<1x1x64xf32> to vector<1x64xf32>
    %c1 = arith.constant 1 : index
    %c0_8 = arith.constant 0 : index
    %c0_9 = arith.constant 0 : index
    %13 = vector.load %arg9[%c1, %c0_8, %c0_9] : memref<2x1x64xf32, #tpu.memory_space<vmem>>, vector<1x1x64xf32>
    %14 = vector.shape_cast %13 : vector<1x1x64xf32> to vector<1x64xf32>
    %cst_10 = arith.constant dense<0.000000e+00> : vector<16xf32>
    %15 = vector.multi_reduction <add>, %10, %cst_10 [1] : vector<16x64xf32> to vector<16xf32>
    %16 = vector.shape_cast %15 : vector<16xf32> to vector<16x1xf32>
    %cst_11 = arith.constant 6.400000e+01 : f32
    %17 = vector.broadcast %cst_11 : f32 to vector<16x1xf32>
    %18 = arith.divf %16, %17 : vector<16x1xf32>
    %19 = arith.mulf %10, %10 : vector<16x64xf32>
    %cst_12 = arith.constant dense<0.000000e+00> : vector<16xf32>
    %20 = vector.multi_reduction <add>, %19, %cst_12 [1] : vector<16x64xf32> to vector<16xf32>
    %21 = vector.shape_cast %20 : vector<16xf32> to vector<16x1xf32>
    %cst_13 = arith.constant 6.400000e+01 : f32
    %22 = vector.broadcast %cst_13 : f32 to vector<16x1xf32>
    %23 = arith.divf %21, %22 : vector<16x1xf32>
    %24 = arith.mulf %18, %18 : vector<16x1xf32>
    %25 = arith.subf %23, %24 : vector<16x1xf32>
    %26 = vector.broadcast %18 : vector<16x1xf32> to vector<16x64xf32>
    %27 = arith.subf %10, %26 : vector<16x64xf32>
    %cst_14 = arith.constant 9.99999996E-13 : f32
    %28 = vector.broadcast %cst_14 : f32 to vector<16x1xf32>
    %29 = arith.addf %25, %28 : vector<16x1xf32>
    %30 = math.rsqrt %29 : vector<16x1xf32>
    %31 = vector.broadcast %30 : vector<16x1xf32> to vector<16x64xf32>
    %32 = arith.mulf %27, %31 : vector<16x64xf32>
    %33 = vector.broadcast %12 : vector<1x64xf32> to vector<16x64xf32>
    %34 = arith.mulf %32, %33 : vector<16x64xf32>
    %35 = vector.broadcast %14 : vector<1x64xf32> to vector<16x64xf32>
    %36 = arith.addf %34, %35 : vector<16x64xf32>
    %c0_15 = arith.constant 0 : index
    %c0_16 = arith.constant 0 : index
    %37 = vector.load %arg2[%c0_15, %c0_16] : memref<64x16xbf16, #tpu.memory_space<vmem>>, vector<64x16xbf16>
    %c0_17 = arith.constant 0 : index
    %c0_18 = arith.constant 0 : index
    %38 = vector.load %arg3[%c0_17, %c0_18] : memref<16x64xbf16, #tpu.memory_space<vmem>>, vector<16x64xbf16>
    %c0_19 = arith.constant 0 : index
    %c0_20 = arith.constant 0 : index
    %39 = vector.load %arg6[%c0_19, %c0_20] : memref<64x64xf32, #tpu.memory_space<vmem>>, vector<64x64xf32>
    %c0_21 = arith.constant 0 : index
    %c0_22 = arith.constant 0 : index
    %40 = vector.load %arg5[%c0_21, %c0_22] : memref<64x16xf32, #tpu.memory_space<vmem>>, vector<64x16xf32>
    %c0_23 = arith.constant 0 : index
    %c0_24 = arith.constant 0 : index
    %41 = vector.load %arg1[%c0_23, %c0_24] : memref<1x16xf32, #tpu.memory_space<vmem>>, vector<1x16xf32>
    %42 = vector.broadcast %41 : vector<1x16xf32> to vector<64x16xf32>
    %43 = arith.mulf %40, %42 : vector<64x16xf32>
    %cst_25 = arith.constant 1.000000e+00 : f32
    %44 = vector.broadcast %cst_25 : f32 to vector<64x16xf32>
    %45 = arith.subf %43, %44 : vector<64x16xf32>
    %cst_26 = arith.constant 1.000000e+09 : f32
    %46 = vector.broadcast %cst_26 : f32 to vector<64x16xf32>
    %47 = arith.mulf %45, %46 : vector<64x16xf32>
    %48 = arith.truncf %36 : vector<16x64xf32> to vector<16x64xbf16>
    %c0_27 = arith.constant 0 : index
    %c0_28 = arith.constant 0 : index
    %c0_29 = arith.constant 0 : index
    %49 = vector.load %arg10[%c0_27, %c0_28, %c0_29] : memref<2x64x192xbf16, #tpu.memory_space<vmem>>, vector<1x64x192xbf16>
    %50 = vector.shape_cast %49 : vector<1x64x192xbf16> to vector<64x192xbf16>
    %cst_30 = arith.constant dense<0.000000e+00> : vector<16x192xf32>
    %51 = tpu.matmul %48, %50, %cst_30 {dimension_numbers = #tpu.dot_dimension_numbers<[1], [0], [0], [1], [0, 0, 1, 1], [], []>} : vector<16x64xbf16>, vector<64x192xbf16>, vector<16x192xf32> -> vector<16x192xf32>
    %c0_31 = arith.constant 0 : index
    %c0_32 = arith.constant 0 : index
    %c0_33 = arith.constant 0 : index
    %52 = vector.load %arg11[%c0_31, %c0_32, %c0_33] : memref<2x1x192xf32, #tpu.memory_space<vmem>>, vector<1x1x192xf32>
    %53 = vector.shape_cast %52 : vector<1x1x192xf32> to vector<1x192xf32>
    %54 = vector.broadcast %53 : vector<1x192xf32> to vector<16x192xf32>
    %55 = arith.addf %51, %54 : vector<16x192xf32>
    %56 = vector.extract_strided_slice %55 {offsets = [0, 0], sizes = [16, 64], strides = [1, 1]} : vector<16x192xf32> to vector<16x64xf32>
    %57 = vector.extract_strided_slice %55 {offsets = [0, 64], sizes = [16, 64], strides = [1, 1]} : vector<16x192xf32> to vector<16x64xf32>
    %58 = vector.extract_strided_slice %55 {offsets = [0, 128], sizes = [16, 64], strides = [1, 1]} : vector<16x192xf32> to vector<16x64xf32>
    %59 = arith.truncf %56 : vector<16x64xf32> to vector<16x64xbf16>
    %cst_34 = arith.constant dense<0.000000e+00> : vector<64x64xf32>
    %60 = tpu.matmul %37, %59, %cst_34 {dimension_numbers = #tpu.dot_dimension_numbers<[1], [0], [0], [1], [0, 0, 1, 1], [], []>} : vector<64x16xbf16>, vector<16x64xbf16>, vector<64x64xf32> -> vector<64x64xf32>
    %61 = arith.mulf %60, %39 : vector<64x64xf32>
    %62 = arith.truncf %61 : vector<64x64xf32> to vector<64x64xbf16>
    %63 = arith.truncf %57 : vector<16x64xf32> to vector<16x64xbf16>
    %cst_35 = arith.constant dense<0.000000e+00> : vector<64x16xf32>
    %64 = tpu.matmul %62, %63, %cst_35 {dimension_numbers = #tpu.dot_dimension_numbers<[1], [1], [0], [0], [0, 0, 1, 0], [], []>} : vector<64x64xbf16>, vector<16x64xbf16>, vector<64x16xf32> -> vector<64x16xf32>
    %65 = arith.addf %64, %47 : vector<64x16xf32>
    %cst_36 = arith.constant dense<0xFF800000> : vector<64xf32>
    %66 = vector.multi_reduction <maximumf>, %65, %cst_36 [1] : vector<64x16xf32> to vector<64xf32>
    %67 = vector.shape_cast %66 : vector<64xf32> to vector<64x1xf32>
    %68 = vector.broadcast %67 : vector<64x1xf32> to vector<64x16xf32>
    %69 = arith.subf %65, %68 : vector<64x16xf32>
    %70 = math.exp %69 : vector<64x16xf32>
    %cst_37 = arith.constant dense<0.000000e+00> : vector<64xf32>
    %71 = vector.multi_reduction <add>, %70, %cst_37 [1] : vector<64x16xf32> to vector<64xf32>
    %72 = vector.shape_cast %71 : vector<64xf32> to vector<64x1xf32>
    %73 = tpu.reciprocal %72 {approx = true} : vector<64x1xf32> -> vector<64x1xf32>
    %74 = vector.broadcast %73 : vector<64x1xf32> to vector<64x16xf32>
    %75 = arith.mulf %70, %74 : vector<64x16xf32>
    %76 = arith.truncf %75 : vector<64x16xf32> to vector<64x16xbf16>
    %77 = arith.truncf %58 : vector<16x64xf32> to vector<16x64xbf16>
    %cst_38 = arith.constant dense<0.000000e+00> : vector<64x64xf32>
    %78 = tpu.matmul %76, %77, %cst_38 {dimension_numbers = #tpu.dot_dimension_numbers<[1], [0], [0], [1], [0, 0, 1, 1], [], []>} : vector<64x16xbf16>, vector<16x64xbf16>, vector<64x64xf32> -> vector<64x64xf32>
    %79 = arith.mulf %78, %39 : vector<64x64xf32>
    %80 = arith.truncf %79 : vector<64x64xf32> to vector<64x64xbf16>
    %cst_39 = arith.constant dense<0.000000e+00> : vector<16x64xf32>
    %81 = tpu.matmul %38, %80, %cst_39 {dimension_numbers = #tpu.dot_dimension_numbers<[1], [0], [0], [1], [0, 0, 1, 1], [], []>} : vector<16x64xbf16>, vector<64x64xbf16>, vector<16x64xf32> -> vector<16x64xf32>
    %82 = arith.truncf %81 : vector<16x64xf32> to vector<16x64xbf16>
    %c0_40 = arith.constant 0 : index
    %c0_41 = arith.constant 0 : index
    %c0_42 = arith.constant 0 : index
    %83 = vector.load %arg12[%c0_40, %c0_41, %c0_42] : memref<2x64x64xbf16, #tpu.memory_space<vmem>>, vector<1x64x64xbf16>
    %84 = vector.shape_cast %83 : vector<1x64x64xbf16> to vector<64x64xbf16>
    %cst_43 = arith.constant dense<0.000000e+00> : vector<16x64xf32>
    %85 = tpu.matmul %82, %84, %cst_43 {dimension_numbers = #tpu.dot_dimension_numbers<[1], [0], [0], [1], [0, 0, 1, 1], [], []>} : vector<16x64xbf16>, vector<64x64xbf16>, vector<16x64xf32> -> vector<16x64xf32>
    %c0_44 = arith.constant 0 : index
    %c0_45 = arith.constant 0 : index
    %c0_46 = arith.constant 0 : index
    %86 = vector.load %arg13[%c0_44, %c0_45, %c0_46] : memref<2x1x64xf32, #tpu.memory_space<vmem>>, vector<1x1x64xf32>
    %87 = vector.shape_cast %86 : vector<1x1x64xf32> to vector<1x64xf32>
    %88 = vector.broadcast %87 : vector<1x64xf32> to vector<16x64xf32>
    %89 = arith.addf %85, %88 : vector<16x64xf32>
    %90 = arith.addf %36, %89 : vector<16x64xf32>
    %c0_47 = arith.constant 0 : index
    %c0_48 = arith.constant 0 : index
    %c0_49 = arith.constant 0 : index
    %c0_50 = arith.constant 0 : index
    %91 = vector.load %arg14[%c0_47, %c0_48, %c0_49, %c0_50] : memref<2x4x1x64xf32, #tpu.memory_space<vmem>>, vector<1x1x1x64xf32>
    %92 = vector.shape_cast %91 : vector<1x1x1x64xf32> to vector<1x64xf32>
    %c0_51 = arith.constant 0 : index
    %c1_52 = arith.constant 1 : index
    %c0_53 = arith.constant 0 : index
    %c0_54 = arith.constant 0 : index
    %93 = vector.load %arg14[%c0_51, %c1_52, %c0_53, %c0_54] : memref<2x4x1x64xf32, #tpu.memory_space<vmem>>, vector<1x1x1x64xf32>
    %94 = vector.shape_cast %93 : vector<1x1x1x64xf32> to vector<1x64xf32>
    %cst_55 = arith.constant dense<0.000000e+00> : vector<16xf32>
    %95 = vector.multi_reduction <add>, %90, %cst_55 [1] : vector<16x64xf32> to vector<16xf32>
    %96 = vector.shape_cast %95 : vector<16xf32> to vector<16x1xf32>
    %cst_56 = arith.constant 6.400000e+01 : f32
    %97 = vector.broadcast %cst_56 : f32 to vector<16x1xf32>
    %98 = arith.divf %96, %97 : vector<16x1xf32>
    %99 = arith.mulf %90, %90 : vector<16x64xf32>
    %cst_57 = arith.constant dense<0.000000e+00> : vector<16xf32>
    %100 = vector.multi_reduction <add>, %99, %cst_57 [1] : vector<16x64xf32> to vector<16xf32>
    %101 = vector.shape_cast %100 : vector<16xf32> to vector<16x1xf32>
    %cst_58 = arith.constant 6.400000e+01 : f32
    %102 = vector.broadcast %cst_58 : f32 to vector<16x1xf32>
    %103 = arith.divf %101, %102 : vector<16x1xf32>
    %104 = arith.mulf %98, %98 : vector<16x1xf32>
    %105 = arith.subf %103, %104 : vector<16x1xf32>
    %106 = vector.broadcast %98 : vector<16x1xf32> to vector<16x64xf32>
    %107 = arith.subf %90, %106 : vector<16x64xf32>
    %cst_59 = arith.constant 9.99999996E-13 : f32
    %108 = vector.broadcast %cst_59 : f32 to vector<16x1xf32>
    %109 = arith.addf %105, %108 : vector<16x1xf32>
    %110 = math.rsqrt %109 : vector<16x1xf32>
    %111 = vector.broadcast %110 : vector<16x1xf32> to vector<16x64xf32>
    %112 = arith.mulf %107, %111 : vector<16x64xf32>
    %113 = vector.broadcast %92 : vector<1x64xf32> to vector<16x64xf32>
    %114 = arith.mulf %112, %113 : vector<16x64xf32>
    %115 = vector.broadcast %94 : vector<1x64xf32> to vector<16x64xf32>
    %116 = arith.addf %114, %115 : vector<16x64xf32>
    %117 = arith.truncf %116 : vector<16x64xf32> to vector<16x64xbf16>
    %c0_60 = arith.constant 0 : index
    %c0_61 = arith.constant 0 : index
    %c0_62 = arith.constant 0 : index
    %118 = vector.load %arg15[%c0_60, %c0_61, %c0_62] : memref<2x64x256xbf16, #tpu.memory_space<vmem>>, vector<1x64x256xbf16>
    %119 = vector.shape_cast %118 : vector<1x64x256xbf16> to vector<64x256xbf16>
    %cst_63 = arith.constant dense<0.000000e+00> : vector<16x256xf32>
    %120 = tpu.matmul %117, %119, %cst_63 {dimension_numbers = #tpu.dot_dimension_numbers<[1], [0], [0], [1], [0, 0, 1, 1], [], []>} : vector<16x64xbf16>, vector<64x256xbf16>, vector<16x256xf32> -> vector<16x256xf32>
    %c0_64 = arith.constant 0 : index
    %c0_65 = arith.constant 0 : index
    %c0_66 = arith.constant 0 : index
    %121 = vector.load %arg16[%c0_64, %c0_65, %c0_66] : memref<2x1x256xf32, #tpu.memory_space<vmem>>, vector<1x1x256xf32>
    %122 = vector.shape_cast %121 : vector<1x1x256xf32> to vector<1x256xf32>
    %123 = vector.broadcast %122 : vector<1x256xf32> to vector<16x256xf32>
    %124 = arith.addf %120, %123 : vector<16x256xf32>
    %125 = arith.mulf %124, %124 : vector<16x256xf32>
    %126 = arith.mulf %124, %125 : vector<16x256xf32>
    %cst_67 = arith.constant 4.471500e-02 : f32
    %127 = vector.broadcast %cst_67 : f32 to vector<16x256xf32>
    %128 = arith.mulf %127, %126 : vector<16x256xf32>
    %129 = arith.addf %124, %128 : vector<16x256xf32>
    %cst_68 = arith.constant 0.797884583 : f32
    %130 = vector.broadcast %cst_68 : f32 to vector<16x256xf32>
    %131 = arith.mulf %130, %129 : vector<16x256xf32>
    %132 = math.tanh %131 : vector<16x256xf32>
    %cst_69 = arith.constant 1.000000e+00 : f32
    %133 = vector.broadcast %cst_69 : f32 to vector<16x256xf32>
    %134 = arith.addf %133, %132 : vector<16x256xf32>
    %cst_70 = arith.constant 5.000000e-01 : f32
    %135 = vector.broadcast %cst_70 : f32 to vector<16x256xf32>
    %136 = arith.mulf %135, %134 : vector<16x256xf32>
    %137 = arith.mulf %124, %136 : vector<16x256xf32>
    %138 = arith.truncf %137 : vector<16x256xf32> to vector<16x256xbf16>
    %c0_71 = arith.constant 0 : index
    %c0_72 = arith.constant 0 : index
    %c0_73 = arith.constant 0 : index
    %139 = vector.load %arg17[%c0_71, %c0_72, %c0_73] : memref<2x256x64xbf16, #tpu.memory_space<vmem>>, vector<1x256x64xbf16>
    %140 = vector.shape_cast %139 : vector<1x256x64xbf16> to vector<256x64xbf16>
    %cst_74 = arith.constant dense<0.000000e+00> : vector<16x64xf32>
    %141 = tpu.matmul %138, %140, %cst_74 {dimension_numbers = #tpu.dot_dimension_numbers<[1], [0], [0], [1], [0, 0, 1, 1], [], []>} : vector<16x256xbf16>, vector<256x64xbf16>, vector<16x64xf32> -> vector<16x64xf32>
    %c0_75 = arith.constant 0 : index
    %c0_76 = arith.constant 0 : index
    %c0_77 = arith.constant 0 : index
    %142 = vector.load %arg18[%c0_75, %c0_76, %c0_77] : memref<2x1x64xf32, #tpu.memory_space<vmem>>, vector<1x1x64xf32>
    %143 = vector.shape_cast %142 : vector<1x1x64xf32> to vector<1x64xf32>
    %144 = vector.broadcast %143 : vector<1x64xf32> to vector<16x64xf32>
    %145 = arith.addf %141, %144 : vector<16x64xf32>
    %146 = arith.addf %116, %145 : vector<16x64xf32>
    %c0_78 = arith.constant 0 : index
    %c2 = arith.constant 2 : index
    %c0_79 = arith.constant 0 : index
    %c0_80 = arith.constant 0 : index
    %147 = vector.load %arg14[%c0_78, %c2, %c0_79, %c0_80] : memref<2x4x1x64xf32, #tpu.memory_space<vmem>>, vector<1x1x1x64xf32>
    %148 = vector.shape_cast %147 : vector<1x1x1x64xf32> to vector<1x64xf32>
    %c0_81 = arith.constant 0 : index
    %c3 = arith.constant 3 : index
    %c0_82 = arith.constant 0 : index
    %c0_83 = arith.constant 0 : index
    %149 = vector.load %arg14[%c0_81, %c3, %c0_82, %c0_83] : memref<2x4x1x64xf32, #tpu.memory_space<vmem>>, vector<1x1x1x64xf32>
    %150 = vector.shape_cast %149 : vector<1x1x1x64xf32> to vector<1x64xf32>
    %cst_84 = arith.constant dense<0.000000e+00> : vector<16xf32>
    %151 = vector.multi_reduction <add>, %146, %cst_84 [1] : vector<16x64xf32> to vector<16xf32>
    %152 = vector.shape_cast %151 : vector<16xf32> to vector<16x1xf32>
    %cst_85 = arith.constant 6.400000e+01 : f32
    %153 = vector.broadcast %cst_85 : f32 to vector<16x1xf32>
    %154 = arith.divf %152, %153 : vector<16x1xf32>
    %155 = arith.mulf %146, %146 : vector<16x64xf32>
    %cst_86 = arith.constant dense<0.000000e+00> : vector<16xf32>
    %156 = vector.multi_reduction <add>, %155, %cst_86 [1] : vector<16x64xf32> to vector<16xf32>
    %157 = vector.shape_cast %156 : vector<16xf32> to vector<16x1xf32>
    %cst_87 = arith.constant 6.400000e+01 : f32
    %158 = vector.broadcast %cst_87 : f32 to vector<16x1xf32>
    %159 = arith.divf %157, %158 : vector<16x1xf32>
    %160 = arith.mulf %154, %154 : vector<16x1xf32>
    %161 = arith.subf %159, %160 : vector<16x1xf32>
    %162 = vector.broadcast %154 : vector<16x1xf32> to vector<16x64xf32>
    %163 = arith.subf %146, %162 : vector<16x64xf32>
    %cst_88 = arith.constant 9.99999996E-13 : f32
    %164 = vector.broadcast %cst_88 : f32 to vector<16x1xf32>
    %165 = arith.addf %161, %164 : vector<16x1xf32>
    %166 = math.rsqrt %165 : vector<16x1xf32>
    %167 = vector.broadcast %166 : vector<16x1xf32> to vector<16x64xf32>
    %168 = arith.mulf %163, %167 : vector<16x64xf32>
    %169 = vector.broadcast %148 : vector<1x64xf32> to vector<16x64xf32>
    %170 = arith.mulf %168, %169 : vector<16x64xf32>
    %171 = vector.broadcast %150 : vector<1x64xf32> to vector<16x64xf32>
    %172 = arith.addf %170, %171 : vector<16x64xf32>
    %173 = arith.truncf %172 : vector<16x64xf32> to vector<16x64xbf16>
    %c1_89 = arith.constant 1 : index
    %c0_90 = arith.constant 0 : index
    %c0_91 = arith.constant 0 : index
    %174 = vector.load %arg10[%c1_89, %c0_90, %c0_91] : memref<2x64x192xbf16, #tpu.memory_space<vmem>>, vector<1x64x192xbf16>
    %175 = vector.shape_cast %174 : vector<1x64x192xbf16> to vector<64x192xbf16>
    %cst_92 = arith.constant dense<0.000000e+00> : vector<16x192xf32>
    %176 = tpu.matmul %173, %175, %cst_92 {dimension_numbers = #tpu.dot_dimension_numbers<[1], [0], [0], [1], [0, 0, 1, 1], [], []>} : vector<16x64xbf16>, vector<64x192xbf16>, vector<16x192xf32> -> vector<16x192xf32>
    %c1_93 = arith.constant 1 : index
    %c0_94 = arith.constant 0 : index
    %c0_95 = arith.constant 0 : index
    %177 = vector.load %arg11[%c1_93, %c0_94, %c0_95] : memref<2x1x192xf32, #tpu.memory_space<vmem>>, vector<1x1x192xf32>
    %178 = vector.shape_cast %177 : vector<1x1x192xf32> to vector<1x192xf32>
    %179 = vector.broadcast %178 : vector<1x192xf32> to vector<16x192xf32>
    %180 = arith.addf %176, %179 : vector<16x192xf32>
    %181 = vector.extract_strided_slice %180 {offsets = [0, 0], sizes = [16, 64], strides = [1, 1]} : vector<16x192xf32> to vector<16x64xf32>
    %182 = vector.extract_strided_slice %180 {offsets = [0, 64], sizes = [16, 64], strides = [1, 1]} : vector<16x192xf32> to vector<16x64xf32>
    %183 = vector.extract_strided_slice %180 {offsets = [0, 128], sizes = [16, 64], strides = [1, 1]} : vector<16x192xf32> to vector<16x64xf32>
    %184 = arith.truncf %181 : vector<16x64xf32> to vector<16x64xbf16>
    %cst_96 = arith.constant dense<0.000000e+00> : vector<64x64xf32>
    %185 = tpu.matmul %37, %184, %cst_96 {dimension_numbers = #tpu.dot_dimension_numbers<[1], [0], [0], [1], [0, 0, 1, 1], [], []>} : vector<64x16xbf16>, vector<16x64xbf16>, vector<64x64xf32> -> vector<64x64xf32>
    %186 = arith.mulf %185, %39 : vector<64x64xf32>
    %187 = arith.truncf %186 : vector<64x64xf32> to vector<64x64xbf16>
    %188 = arith.truncf %182 : vector<16x64xf32> to vector<16x64xbf16>
    %cst_97 = arith.constant dense<0.000000e+00> : vector<64x16xf32>
    %189 = tpu.matmul %187, %188, %cst_97 {dimension_numbers = #tpu.dot_dimension_numbers<[1], [1], [0], [0], [0, 0, 1, 0], [], []>} : vector<64x64xbf16>, vector<16x64xbf16>, vector<64x16xf32> -> vector<64x16xf32>
    %190 = arith.addf %189, %47 : vector<64x16xf32>
    %cst_98 = arith.constant dense<0xFF800000> : vector<64xf32>
    %191 = vector.multi_reduction <maximumf>, %190, %cst_98 [1] : vector<64x16xf32> to vector<64xf32>
    %192 = vector.shape_cast %191 : vector<64xf32> to vector<64x1xf32>
    %193 = vector.broadcast %192 : vector<64x1xf32> to vector<64x16xf32>
    %194 = arith.subf %190, %193 : vector<64x16xf32>
    %195 = math.exp %194 : vector<64x16xf32>
    %cst_99 = arith.constant dense<0.000000e+00> : vector<64xf32>
    %196 = vector.multi_reduction <add>, %195, %cst_99 [1] : vector<64x16xf32> to vector<64xf32>
    %197 = vector.shape_cast %196 : vector<64xf32> to vector<64x1xf32>
    %198 = tpu.reciprocal %197 {approx = true} : vector<64x1xf32> -> vector<64x1xf32>
    %199 = vector.broadcast %198 : vector<64x1xf32> to vector<64x16xf32>
    %200 = arith.mulf %195, %199 : vector<64x16xf32>
    %201 = arith.truncf %200 : vector<64x16xf32> to vector<64x16xbf16>
    %202 = arith.truncf %183 : vector<16x64xf32> to vector<16x64xbf16>
    %cst_100 = arith.constant dense<0.000000e+00> : vector<64x64xf32>
    %203 = tpu.matmul %201, %202, %cst_100 {dimension_numbers = #tpu.dot_dimension_numbers<[1], [0], [0], [1], [0, 0, 1, 1], [], []>} : vector<64x16xbf16>, vector<16x64xbf16>, vector<64x64xf32> -> vector<64x64xf32>
    %204 = arith.mulf %203, %39 : vector<64x64xf32>
    %205 = arith.truncf %204 : vector<64x64xf32> to vector<64x64xbf16>
    %cst_101 = arith.constant dense<0.000000e+00> : vector<16x64xf32>
    %206 = tpu.matmul %38, %205, %cst_101 {dimension_numbers = #tpu.dot_dimension_numbers<[1], [0], [0], [1], [0, 0, 1, 1], [], []>} : vector<16x64xbf16>, vector<64x64xbf16>, vector<16x64xf32> -> vector<16x64xf32>
    %207 = arith.truncf %206 : vector<16x64xf32> to vector<16x64xbf16>
    %c1_102 = arith.constant 1 : index
    %c0_103 = arith.constant 0 : index
    %c0_104 = arith.constant 0 : index
    %208 = vector.load %arg12[%c1_102, %c0_103, %c0_104] : memref<2x64x64xbf16, #tpu.memory_space<vmem>>, vector<1x64x64xbf16>
    %209 = vector.shape_cast %208 : vector<1x64x64xbf16> to vector<64x64xbf16>
    %cst_105 = arith.constant dense<0.000000e+00> : vector<16x64xf32>
    %210 = tpu.matmul %207, %209, %cst_105 {dimension_numbers = #tpu.dot_dimension_numbers<[1], [0], [0], [1], [0, 0, 1, 1], [], []>} : vector<16x64xbf16>, vector<64x64xbf16>, vector<16x64xf32> -> vector<16x64xf32>
    %c1_106 = arith.constant 1 : index
    %c0_107 = arith.constant 0 : index
    %c0_108 = arith.constant 0 : index
    %211 = vector.load %arg13[%c1_106, %c0_107, %c0_108] : memref<2x1x64xf32, #tpu.memory_space<vmem>>, vector<1x1x64xf32>
    %212 = vector.shape_cast %211 : vector<1x1x64xf32> to vector<1x64xf32>
    %213 = vector.broadcast %212 : vector<1x64xf32> to vector<16x64xf32>
    %214 = arith.addf %210, %213 : vector<16x64xf32>
    %215 = arith.addf %172, %214 : vector<16x64xf32>
    %c1_109 = arith.constant 1 : index
    %c0_110 = arith.constant 0 : index
    %c0_111 = arith.constant 0 : index
    %c0_112 = arith.constant 0 : index
    %216 = vector.load %arg14[%c1_109, %c0_110, %c0_111, %c0_112] : memref<2x4x1x64xf32, #tpu.memory_space<vmem>>, vector<1x1x1x64xf32>
    %217 = vector.shape_cast %216 : vector<1x1x1x64xf32> to vector<1x64xf32>
    %c1_113 = arith.constant 1 : index
    %c1_114 = arith.constant 1 : index
    %c0_115 = arith.constant 0 : index
    %c0_116 = arith.constant 0 : index
    %218 = vector.load %arg14[%c1_113, %c1_114, %c0_115, %c0_116] : memref<2x4x1x64xf32, #tpu.memory_space<vmem>>, vector<1x1x1x64xf32>
    %219 = vector.shape_cast %218 : vector<1x1x1x64xf32> to vector<1x64xf32>
    %cst_117 = arith.constant dense<0.000000e+00> : vector<16xf32>
    %220 = vector.multi_reduction <add>, %215, %cst_117 [1] : vector<16x64xf32> to vector<16xf32>
    %221 = vector.shape_cast %220 : vector<16xf32> to vector<16x1xf32>
    %cst_118 = arith.constant 6.400000e+01 : f32
    %222 = vector.broadcast %cst_118 : f32 to vector<16x1xf32>
    %223 = arith.divf %221, %222 : vector<16x1xf32>
    %224 = arith.mulf %215, %215 : vector<16x64xf32>
    %cst_119 = arith.constant dense<0.000000e+00> : vector<16xf32>
    %225 = vector.multi_reduction <add>, %224, %cst_119 [1] : vector<16x64xf32> to vector<16xf32>
    %226 = vector.shape_cast %225 : vector<16xf32> to vector<16x1xf32>
    %cst_120 = arith.constant 6.400000e+01 : f32
    %227 = vector.broadcast %cst_120 : f32 to vector<16x1xf32>
    %228 = arith.divf %226, %227 : vector<16x1xf32>
    %229 = arith.mulf %223, %223 : vector<16x1xf32>
    %230 = arith.subf %228, %229 : vector<16x1xf32>
    %231 = vector.broadcast %223 : vector<16x1xf32> to vector<16x64xf32>
    %232 = arith.subf %215, %231 : vector<16x64xf32>
    %cst_121 = arith.constant 9.99999996E-13 : f32
    %233 = vector.broadcast %cst_121 : f32 to vector<16x1xf32>
    %234 = arith.addf %230, %233 : vector<16x1xf32>
    %235 = math.rsqrt %234 : vector<16x1xf32>
    %236 = vector.broadcast %235 : vector<16x1xf32> to vector<16x64xf32>
    %237 = arith.mulf %232, %236 : vector<16x64xf32>
    %238 = vector.broadcast %217 : vector<1x64xf32> to vector<16x64xf32>
    %239 = arith.mulf %237, %238 : vector<16x64xf32>
    %240 = vector.broadcast %219 : vector<1x64xf32> to vector<16x64xf32>
    %241 = arith.addf %239, %240 : vector<16x64xf32>
    %242 = arith.truncf %241 : vector<16x64xf32> to vector<16x64xbf16>
    %c1_122 = arith.constant 1 : index
    %c0_123 = arith.constant 0 : index
    %c0_124 = arith.constant 0 : index
    %243 = vector.load %arg15[%c1_122, %c0_123, %c0_124] : memref<2x64x256xbf16, #tpu.memory_space<vmem>>, vector<1x64x256xbf16>
    %244 = vector.shape_cast %243 : vector<1x64x256xbf16> to vector<64x256xbf16>
    %cst_125 = arith.constant dense<0.000000e+00> : vector<16x256xf32>
    %245 = tpu.matmul %242, %244, %cst_125 {dimension_numbers = #tpu.dot_dimension_numbers<[1], [0], [0], [1], [0, 0, 1, 1], [], []>} : vector<16x64xbf16>, vector<64x256xbf16>, vector<16x256xf32> -> vector<16x256xf32>
    %c1_126 = arith.constant 1 : index
    %c0_127 = arith.constant 0 : index
    %c0_128 = arith.constant 0 : index
    %246 = vector.load %arg16[%c1_126, %c0_127, %c0_128] : memref<2x1x256xf32, #tpu.memory_space<vmem>>, vector<1x1x256xf32>
    %247 = vector.shape_cast %246 : vector<1x1x256xf32> to vector<1x256xf32>
    %248 = vector.broadcast %247 : vector<1x256xf32> to vector<16x256xf32>
    %249 = arith.addf %245, %248 : vector<16x256xf32>
    %250 = arith.mulf %249, %249 : vector<16x256xf32>
    %251 = arith.mulf %249, %250 : vector<16x256xf32>
    %cst_129 = arith.constant 4.471500e-02 : f32
    %252 = vector.broadcast %cst_129 : f32 to vector<16x256xf32>
    %253 = arith.mulf %252, %251 : vector<16x256xf32>
    %254 = arith.addf %249, %253 : vector<16x256xf32>
    %cst_130 = arith.constant 0.797884583 : f32
    %255 = vector.broadcast %cst_130 : f32 to vector<16x256xf32>
    %256 = arith.mulf %255, %254 : vector<16x256xf32>
    %257 = math.tanh %256 : vector<16x256xf32>
    %cst_131 = arith.constant 1.000000e+00 : f32
    %258 = vector.broadcast %cst_131 : f32 to vector<16x256xf32>
    %259 = arith.addf %258, %257 : vector<16x256xf32>
    %cst_132 = arith.constant 5.000000e-01 : f32
    %260 = vector.broadcast %cst_132 : f32 to vector<16x256xf32>
    %261 = arith.mulf %260, %259 : vector<16x256xf32>
    %262 = arith.mulf %249, %261 : vector<16x256xf32>
    %263 = arith.truncf %262 : vector<16x256xf32> to vector<16x256xbf16>
    %c1_133 = arith.constant 1 : index
    %c0_134 = arith.constant 0 : index
    %c0_135 = arith.constant 0 : index
    %264 = vector.load %arg17[%c1_133, %c0_134, %c0_135] : memref<2x256x64xbf16, #tpu.memory_space<vmem>>, vector<1x256x64xbf16>
    %265 = vector.shape_cast %264 : vector<1x256x64xbf16> to vector<256x64xbf16>
    %cst_136 = arith.constant dense<0.000000e+00> : vector<16x64xf32>
    %266 = tpu.matmul %263, %265, %cst_136 {dimension_numbers = #tpu.dot_dimension_numbers<[1], [0], [0], [1], [0, 0, 1, 1], [], []>} : vector<16x256xbf16>, vector<256x64xbf16>, vector<16x64xf32> -> vector<16x64xf32>
    %c1_137 = arith.constant 1 : index
    %c0_138 = arith.constant 0 : index
    %c0_139 = arith.constant 0 : index
    %267 = vector.load %arg18[%c1_137, %c0_138, %c0_139] : memref<2x1x64xf32, #tpu.memory_space<vmem>>, vector<1x1x64xf32>
    %268 = vector.shape_cast %267 : vector<1x1x64xf32> to vector<1x64xf32>
    %269 = vector.broadcast %268 : vector<1x64xf32> to vector<16x64xf32>
    %270 = arith.addf %266, %269 : vector<16x64xf32>
    %271 = arith.addf %241, %270 : vector<16x64xf32>
    %c1_140 = arith.constant 1 : index
    %c2_141 = arith.constant 2 : index
    %c0_142 = arith.constant 0 : index
    %c0_143 = arith.constant 0 : index
    %272 = vector.load %arg14[%c1_140, %c2_141, %c0_142, %c0_143] : memref<2x4x1x64xf32, #tpu.memory_space<vmem>>, vector<1x1x1x64xf32>
    %273 = vector.shape_cast %272 : vector<1x1x1x64xf32> to vector<1x64xf32>
    %c1_144 = arith.constant 1 : index
    %c3_145 = arith.constant 3 : index
    %c0_146 = arith.constant 0 : index
    %c0_147 = arith.constant 0 : index
    %274 = vector.load %arg14[%c1_144, %c3_145, %c0_146, %c0_147] : memref<2x4x1x64xf32, #tpu.memory_space<vmem>>, vector<1x1x1x64xf32>
    %275 = vector.shape_cast %274 : vector<1x1x1x64xf32> to vector<1x64xf32>
    %cst_148 = arith.constant dense<0.000000e+00> : vector<16xf32>
    %276 = vector.multi_reduction <add>, %271, %cst_148 [1] : vector<16x64xf32> to vector<16xf32>
    %277 = vector.shape_cast %276 : vector<16xf32> to vector<16x1xf32>
    %cst_149 = arith.constant 6.400000e+01 : f32
    %278 = vector.broadcast %cst_149 : f32 to vector<16x1xf32>
    %279 = arith.divf %277, %278 : vector<16x1xf32>
    %280 = arith.mulf %271, %271 : vector<16x64xf32>
    %cst_150 = arith.constant dense<0.000000e+00> : vector<16xf32>
    %281 = vector.multi_reduction <add>, %280, %cst_150 [1] : vector<16x64xf32> to vector<16xf32>
    %282 = vector.shape_cast %281 : vector<16xf32> to vector<16x1xf32>
    %cst_151 = arith.constant 6.400000e+01 : f32
    %283 = vector.broadcast %cst_151 : f32 to vector<16x1xf32>
    %284 = arith.divf %282, %283 : vector<16x1xf32>
    %285 = arith.mulf %279, %279 : vector<16x1xf32>
    %286 = arith.subf %284, %285 : vector<16x1xf32>
    %287 = vector.broadcast %279 : vector<16x1xf32> to vector<16x64xf32>
    %288 = arith.subf %271, %287 : vector<16x64xf32>
    %cst_152 = arith.constant 9.99999996E-13 : f32
    %289 = vector.broadcast %cst_152 : f32 to vector<16x1xf32>
    %290 = arith.addf %286, %289 : vector<16x1xf32>
    %291 = math.rsqrt %290 : vector<16x1xf32>
    %292 = vector.broadcast %291 : vector<16x1xf32> to vector<16x64xf32>
    %293 = arith.mulf %288, %292 : vector<16x64xf32>
    %294 = vector.broadcast %273 : vector<1x64xf32> to vector<16x64xf32>
    %295 = arith.mulf %293, %294 : vector<16x64xf32>
    %296 = vector.broadcast %275 : vector<1x64xf32> to vector<16x64xf32>
    %297 = arith.addf %295, %296 : vector<16x64xf32>
    %c0_153 = arith.constant 0 : index
    %c0_154 = arith.constant 0 : index
    %298 = vector.load %arg4[%c0_153, %c0_154] : memref<8x16xbf16, #tpu.memory_space<vmem>>, vector<8x16xbf16>
    %299 = arith.truncf %297 : vector<16x64xf32> to vector<16x64xbf16>
    %cst_155 = arith.constant dense<0.000000e+00> : vector<8x64xf32>
    %300 = tpu.matmul %298, %299, %cst_155 {dimension_numbers = #tpu.dot_dimension_numbers<[1], [0], [0], [1], [0, 0, 1, 1], [], []>} : vector<8x16xbf16>, vector<16x64xbf16>, vector<8x64xf32> -> vector<8x64xf32>
    %301 = arith.truncf %300 : vector<8x64xf32> to vector<8x64xbf16>
    %c0_156 = arith.constant 0 : index
    %c0_157 = arith.constant 0 : index
    %302 = vector.load %arg19[%c0_156, %c0_157] : memref<64x32xbf16, #tpu.memory_space<vmem>>, vector<64x32xbf16>
    %cst_158 = arith.constant dense<0.000000e+00> : vector<8x32xf32>
    %303 = tpu.matmul %301, %302, %cst_158 {dimension_numbers = #tpu.dot_dimension_numbers<[1], [0], [0], [1], [0, 0, 1, 1], [], []>} : vector<8x64xbf16>, vector<64x32xbf16>, vector<8x32xf32> -> vector<8x32xf32>
    %c0_159 = arith.constant 0 : index
    %c0_160 = arith.constant 0 : index
    %304 = vector.load %arg20[%c0_159, %c0_160] : memref<1x32xf32, #tpu.memory_space<vmem>>, vector<1x32xf32>
    %305 = vector.broadcast %304 : vector<1x32xf32> to vector<8x32xf32>
    %306 = arith.addf %303, %305 : vector<8x32xf32>
    %cst_161 = arith.constant 0.000000e+00 : f32
    %307 = vector.broadcast %cst_161 : f32 to vector<8x32xf32>
    %308 = arith.maximumf %306, %307 : vector<8x32xf32>
    %309 = arith.truncf %308 : vector<8x32xf32> to vector<8x32xbf16>
    %c0_162 = arith.constant 0 : index
    %c0_163 = arith.constant 0 : index
    %310 = vector.load %arg21[%c0_162, %c0_163] : memref<32x16xbf16, #tpu.memory_space<vmem>>, vector<32x16xbf16>
    %cst_164 = arith.constant dense<0.000000e+00> : vector<8x16xf32>
    %311 = tpu.matmul %309, %310, %cst_164 {dimension_numbers = #tpu.dot_dimension_numbers<[1], [0], [0], [1], [0, 0, 1, 1], [], []>} : vector<8x32xbf16>, vector<32x16xbf16>, vector<8x16xf32> -> vector<8x16xf32>
    %c0_165 = arith.constant 0 : index
    %c0_166 = arith.constant 0 : index
    %312 = vector.load %arg22[%c0_165, %c0_166] : memref<1x16xf32, #tpu.memory_space<vmem>>, vector<1x16xf32>
    %313 = vector.broadcast %312 : vector<1x16xf32> to vector<8x16xf32>
    %314 = arith.addf %311, %313 : vector<8x16xf32>
    %cst_167 = arith.constant 0.000000e+00 : f32
    %315 = vector.broadcast %cst_167 : f32 to vector<8x16xf32>
    %316 = arith.maximumf %314, %315 : vector<8x16xf32>
    %317 = arith.truncf %316 : vector<8x16xf32> to vector<8x16xbf16>
    %c0_168 = arith.constant 0 : index
    %c0_169 = arith.constant 0 : index
    %318 = vector.load %arg23[%c0_168, %c0_169] : memref<16x128xbf16, #tpu.memory_space<vmem>>, vector<16x128xbf16>
    %cst_170 = arith.constant dense<0.000000e+00> : vector<8x128xf32>
    %319 = tpu.matmul %317, %318, %cst_170 {dimension_numbers = #tpu.dot_dimension_numbers<[1], [0], [0], [1], [0, 0, 1, 1], [], []>} : vector<8x16xbf16>, vector<16x128xbf16>, vector<8x128xf32> -> vector<8x128xf32>
    %c0_171 = arith.constant 0 : index
    %c0_172 = arith.constant 0 : index
    %320 = vector.load %arg24[%c0_171, %c0_172] : memref<1x128xf32, #tpu.memory_space<vmem>>, vector<1x128xf32>
    %321 = vector.broadcast %320 : vector<1x128xf32> to vector<8x128xf32>
    %322 = arith.addf %319, %321 : vector<8x128xf32>
    %c0_173 = arith.constant 0 : index
    %c0_174 = arith.constant 0 : index
    %323 = vector.load %arg25[%c0_173, %c0_174] : memref<8x128xf32, #tpu.memory_space<vmem>>, vector<8x128xf32>
    tpu.vector_store %arg25[%c0_173, %c0_174], %322 {strides = array<i32>} : memref<8x128xf32, #tpu.memory_space<vmem>>, vector<8x128xf32>,
    return
  }
}

</mosaic_0001>

<llo_original>
// kernel: forward.1
$region0: #{forward.1}
  #allocation0 [shape = 'u32[]', space=smem, size = 0x4, offset = 0x4, fixed_abs, tag = 'smem constant byte address 0x4 - core index']
  #allocation1 [shape = 'u32[72,128]{1,0:T(1,128)}', space=vmem, size = 0x9000, scoped, tag = 'internal scratch']
  %s0 = inlined_call_operand.vmem [shape: s32[16,1], index: 0, kind: input, shape index: {}]
  %s1 = inlined_call_operand.vmem [shape: f32[1,16], index: 1, kind: input, shape index: {}]
  %s2 = inlined_call_operand.vmem [shape: bf16[64,16], index: 2, kind: input, shape index: {}]
  %s3 = inlined_call_operand.vmem [shape: bf16[16,64], index: 3, kind: input, shape index: {}]
  %s4 = inlined_call_operand.vmem [shape: bf16[8,16], index: 4, kind: input, shape index: {}]
  %s5 = inlined_call_operand.vmem [shape: f32[64,16], index: 5, kind: input, shape index: {}]
  %s6 = inlined_call_operand.vmem [shape: f32[64,64], index: 6, kind: input, shape index: {}]
  %s7 = inlined_call_operand.vmem [shape: f32[16,64], index: 7, kind: input, shape index: {}]
  %s8 = inlined_call_operand.vmem [shape: bf16[128,64], index: 8, kind: input, shape index: {}]
  %s9 = inlined_call_operand.vmem [shape: f32[2,1,64], index: 9, kind: input, shape index: {}]
  %s10 = inlined_call_operand.vmem [shape: bf16[2,64,192], index: 10, kind: input, shape index: {}]
  %s11 = inlined_call_operand.vmem [shape: f32[2,1,192], index: 11, kind: input, shape index: {}]
  %s12 = inlined_call_operand.vmem [shape: bf16[2,64,64], index: 12, kind: input, shape index: {}]
  %s13 = inlined_call_operand.vmem [shape: f32[2,1,64], index: 13, kind: input, shape index: {}]
  %s14 = inlined_call_operand.vmem [shape: f32[2,4,1,64], index: 14, kind: input, shape index: {}]
  %s15 = inlined_call_operand.vmem [shape: bf16[2,64,256], index: 15, kind: input, shape index: {}]
  %s16 = inlined_call_operand.vmem [shape: f32[2,1,256], index: 16, kind: input, shape index: {}]
  %s17 = inlined_call_operand.vmem [shape: bf16[2,256,64], index: 17, kind: input, shape index: {}]
  %s18 = inlined_call_operand.vmem [shape: f32[2,1,64], index: 18, kind: input, shape index: {}]
  %s19 = inlined_call_operand.vmem [shape: bf16[64,32], index: 19, kind: input, shape index: {}]
  %s20 = inlined_call_operand.vmem [shape: f32[1,32], index: 20, kind: input, shape index: {}]
  %s21 = inlined_call_operand.vmem [shape: bf16[32,16], index: 21, kind: input, shape index: {}]
  %s22 = inlined_call_operand.vmem [shape: f32[1,16], index: 22, kind: input, shape index: {}]
  %s23 = inlined_call_operand.vmem [shape: bf16[16,128], index: 23, kind: input, shape index: {}]
  %s24 = inlined_call_operand.vmem [shape: f32[1,128], index: 24, kind: input, shape index: {}]
  %s25 = inlined_call_operand.vmem [shape: f32[8,128], index: 25, kind: output, shape index: {}]
  %s26 = sld [smem:[#allocation0]]
  $region110: #{forward.1} parent=0
    _
  %s28 = ssub.s32 1, %s26
  %s29 = scalar_select 0, %s28, %s26
  // Predicated region
  $region2: #{forward.1} parent=0 // pred_check
    _
  $region3: #{forward.1} parent=0 // pred_check_branch
    %31 = sbr.rel (0) target = $region5
  $region4: #{forward.1} parent=0 // pred_region
    _
  $region5: #{forward.1} parent=0 // pred_fallthru
    _
  // Predicated region
  $region6: #{forward.1} parent=0 // pred_check
    _
  $region7: #{forward.1} parent=0 // pred_check_branch
    %33 = sbr.rel (0) target = $region9
  $region8: #{forward.1} parent=0 // pred_region
    _
  $region9: #{forward.1} parent=0 // pred_fallthru
    _
  // Predicated region
  $region10: #{forward.1} parent=0 // pred_check
    _
  $region11: #{forward.1} parent=0 // pred_check_branch
    %35 = sbr.rel (0) target = $region13
  $region12: #{forward.1} parent=0 // pred_region
    _
  $region13: #{forward.1} parent=0 // pred_fallthru
    _
  // Predicated region
  $region14: #{forward.1} parent=0 // pred_check
    _
  $region15: #{forward.1} parent=0 // pred_check_branch
    %37 = sbr.rel (0) target = $region17
  $region16: #{forward.1} parent=0 // pred_region
    _
  $region17: #{forward.1} parent=0 // pred_fallthru
    _
  // Predicated region
  $region18: #{forward.1} parent=0 // pred_check
    _
  $region19: #{forward.1} parent=0 // pred_check_branch
    %39 = sbr.rel (0) target = $region21
  $region20: #{forward.1} parent=0 // pred_region
    _
  $region21: #{forward.1} parent=0 // pred_fallthru
    _
  // Predicated region
  $region22: #{forward.1} parent=0 // pred_check
    _
  $region23: #{forward.1} parent=0 // pred_check_branch
    %41 = sbr.rel (0) target = $region25
  $region24: #{forward.1} parent=0 // pred_region
    _
  $region25: #{forward.1} parent=0 // pred_fallthru
    _
  // Predicated region
  $region26: #{forward.1} parent=0 // pred_check
    _
  $region27: #{forward.1} parent=0 // pred_check_branch
    %43 = sbr.rel (0) target = $region29
  $region28: #{forward.1} parent=0 // pred_region
    _
  $region29: #{forward.1} parent=0 // pred_fallthru
    _
  // Predicated region
  $region30: #{forward.1} parent=0 // pred_check
    _
  $region31: #{forward.1} parent=0 // pred_check_branch
    %45 = sbr.rel (0) target = $region33
  $region32: #{forward.1} parent=0 // pred_region
    _
  $region33: #{forward.1} parent=0 // pred_fallthru
    _
  // Predicated region
  $region34: #{forward.1} parent=0 // pred_check
    _
  $region35: #{forward.1} parent=0 // pred_check_branch
    %47 = sbr.rel (0) target = $region37
  $region36: #{forward.1} parent=0 // pred_region
    _
  $region37: #{forward.1} parent=0 // pred_fallthru
    _
  // Predicated region
  $region38: #{forward.1} parent=0 // pred_check
    _
  $region39: #{forward.1} parent=0 // pred_check_branch
    %49 = sbr.rel (0) target = $region41
  $region40: #{forward.1} parent=0 // pred_region
    _
  $region41: #{forward.1} parent=0 // pred_fallthru
    _
  // Predicated region
  $region42: #{forward.1} parent=0 // pred_check
    _
  $region43: #{forward.1} parent=0 // pred_check_branch
    %51 = sbr.rel (0) target = $region45
  $region44: #{forward.1} parent=0 // pred_region
    _
  $region45: #{forward.1} parent=0 // pred_fallthru
    _
  // Predicated region
  $region46: #{forward.1} parent=0 // pred_check
    _
  $region47: #{forward.1} parent=0 // pred_check_branch
    %53 = sbr.rel (0) target = $region49
  $region48: #{forward.1} parent=0 // pred_region
    _
  $region49: #{forward.1} parent=0 // pred_fallthru
    _
  // Predicated region
  $region50: #{forward.1} parent=0 // pred_check
    _
  $region51: #{forward.1} parent=0 // pred_check_branch
    %55 = sbr.rel (0) target = $region53
  $region52: #{forward.1} parent=0 // pred_region
    _
  $region53: #{forward.1} parent=0 // pred_fallthru
    _
  // Predicated region
  $region54: #{forward.1} parent=0 // pred_check
    _
  $region55: #{forward.1} parent=0 // pred_check_branch
    %57 = sbr.rel (0) target = $region57
  $region56: #{forward.1} parent=0 // pred_region
    _
  $region57: #{forward.1} parent=0 // pred_fallthru
    _
  // Predicated region
  $region58: #{forward.1} parent=0 // pred_check
    _
  $region59: #{forward.1} parent=0 // pred_check_branch
    %59 = sbr.rel (0) target = $region61
  $region60: #{forward.1} parent=0 // pred_region
    _
  $region61: #{forward.1} parent=0 // pred_fallthru
    _
  // Predicated region
  $region62: #{forward.1} parent=0 // pred_check
    _
  $region63: #{forward.1} parent=0 // pred_check_branch
    %61 = sbr.rel (0) target = $region65
  $region64: #{forward.1} parent=0 // pred_region
    _
  $region65: #{forward.1} parent=0 // pred_fallthru
    _
  // Predicated region
  $region66: #{forward.1} parent=0 // pred_check
    _
  $region67: #{forward.1} parent=0 // pred_check_branch
    %63 = sbr.rel (0) target = $region69
  $region68: #{forward.1} parent=0 // pred_region
    _
  $region69: #{forward.1} parent=0 // pred_fallthru
    _
  // Predicated region
  $region70: #{forward.1} parent=0 // pred_check
    _
  $region71: #{forward.1} parent=0 // pred_check_branch
    %65 = sbr.rel (0) target = $region73
  $region72: #{forward.1} parent=0 // pred_region
    _
  $region73: #{forward.1} parent=0 // pred_fallthru
    _
  // Predicated region
  $region74: #{forward.1} parent=0 // pred_check
    _
  $region75: #{forward.1} parent=0 // pred_check_branch
    %67 = sbr.rel (0) target = $region77
  $region76: #{forward.1} parent=0 // pred_region
    _
  $region77: #{forward.1} parent=0 // pred_fallthru
    _
  // Predicated region
  $region78: #{forward.1} parent=0 // pred_check
    _
  $region79: #{forward.1} parent=0 // pred_check_branch
    %69 = sbr.rel (0) target = $region81
  $region80: #{forward.1} parent=0 // pred_region
    _
  $region81: #{forward.1} parent=0 // pred_fallthru
    _
  // Predicated region
  $region82: #{forward.1} parent=0 // pred_check
    _
  $region83: #{forward.1} parent=0 // pred_check_branch
    %71 = sbr.rel (0) target = $region85
  $region84: #{forward.1} parent=0 // pred_region
    _
  $region85: #{forward.1} parent=0 // pred_fallthru
    _
  // Predicated region
  $region86: #{forward.1} parent=0 // pred_check
    _
  $region87: #{forward.1} parent=0 // pred_check_branch
    %73 = sbr.rel (0) target = $region89
  $region88: #{forward.1} parent=0 // pred_region
    _
  $region89: #{forward.1} parent=0 // pred_fallthru
    _
  // Predicated region
  $region90: #{forward.1} parent=0 // pred_check
    _
  $region91: #{forward.1} parent=0 // pred_check_branch
    %75 = sbr.rel (0) target = $region93
  $region92: #{forward.1} parent=0 // pred_region
    _
  $region93: #{forward.1} parent=0 // pred_fallthru
    _
  // Predicated region
  $region94: #{forward.1} parent=0 // pred_check
    _
  $region95: #{forward.1} parent=0 // pred_check_branch
    %77 = sbr.rel (0) target = $region97
  $region96: #{forward.1} parent=0 // pred_region
    _
  $region97: #{forward.1} parent=0 // pred_fallthru
    _
  // Predicated region
  $region98: #{forward.1} parent=0 // pred_check
    _
  $region99: #{forward.1} parent=0 // pred_check_branch
    %79 = sbr.rel (0) target = $region101
  $region100: #{forward.1} parent=0 // pred_region
    _
  $region101: #{forward.1} parent=0 // pred_fallthru
    _
  %v81 = vld [vmem:[%s0] sm:$0xff]
  %v82 = vld [vmem:[%s0 + $0x8] sm:$0xff]
  %v83 = vlaneseq
  %v84 = vand.u32 %v83, 127
  %85 = vset.pattern.permute.xlu0 0
  %86 = vperm.xlu0 %85, %v81
  %v87 = vpop.permute.xlu0 %86
  %88 = vset.pattern.permute.xlu0 0
  %89 = vperm.xlu0 %88, %v82
  %v90 = vpop.permute.xlu0 %89
  %vm91 = vcmp.eq.s32.totalorder %v84, %v87
  %vm92 = vcmp.eq.s32.totalorder %v84, %v90
  %v93 = vsel %vm91, 1, 0
  %v94 = vsel %vm92, 1, 0
  %v95 = vcvt.s32.f32 %v93
  %v96 = vcvt.s32.f32 %v94
  %v97 = vpack.c.bf16 %v96, %v95
  %v98 = vld [vmem:[%s8] sm:$0xf]
  %v99 = vld [vmem:[%s8 + $0x4] sm:$0xf]
  %v100 = vld [vmem:[%s8 + $0x8] sm:$0xf]
  %v101 = vld [vmem:[%s8 + $0xc] sm:$0xf]
  %v102 = vld [vmem:[%s8 + $0x10] sm:$0xf]
  %v103 = vld [vmem:[%s8 + $0x14] sm:$0xf]
  %v104 = vld [vmem:[%s8 + $0x18] sm:$0xf]
  %v105 = vld [vmem:[%s8 + $0x1c] sm:$0xf]
  %v106 = vld [vmem:[%s8 + $0x20] sm:$0xf]
  %v107 = vld [vmem:[%s8 + $0x24] sm:$0xf]
  %v108 = vld [vmem:[%s8 + $0x28] sm:$0xf]
  %v109 = vld [vmem:[%s8 + $0x2c] sm:$0xf]
  %v110 = vld [vmem:[%s8 + $0x30] sm:$0xf]
  %v111 = vld [vmem:[%s8 + $0x34] sm:$0xf]
  %v112 = vld [vmem:[%s8 + $0x38] sm:$0xf]
  %v113 = vld [vmem:[%s8 + $0x3c] sm:$0xf]
  %v114 = vld [vmem:[%s7] sm:$0xff]
  %v115 = vld [vmem:[%s7 + $0x8] sm:$0xff]
  %v132 = vunpack.c.l.b16 %v98
  %v133 = vunpack.c.l.b16 %v99
  %v134 = vunpack.c.l.b16 %v100
  %v135 = vunpack.c.l.b16 %v101
  %v136 = vunpack.c.l.b16 %v102
  %v137 = vunpack.c.l.b16 %v103
  %v138 = vunpack.c.l.b16 %v104
  %v139 = vunpack.c.l.b16 %v105
  %v140 = vunpack.c.l.b16 %v106
  %v141 = vunpack.c.l.b16 %v107
  %v142 = vunpack.c.l.b16 %v108
  %v143 = vunpack.c.l.b16 %v109
  %v144 = vunpack.c.l.b16 %v110
  %v145 = vunpack.c.l.b16 %v111
  %v146 = vunpack.c.l.b16 %v112
  %v147 = vunpack.c.l.b16 %v113
  %v148 = vpack.c.b16 %v133, %v132
  %v149 = vpack.c.b16 %v135, %v134
  %v150 = vpack.c.b16 %v137, %v136
  %v151 = vpack.c.b16 %v139, %v138
  %v152 = vpack.c.b16 %v141, %v140
  %v153 = vpack.c.b16 %v143, %v142
  %v154 = vpack.c.b16 %v145, %v144
  %v155 = vpack.c.b16 %v147, %v146
  %164 = vmatpush.bf16.msra.mxu0 %v155
  %165 = vmatpush.bf16.msra.mxu0 %v154
  %166 = vmatpush.bf16.msra.mxu0 %v153
  %167 = vmatpush.bf16.msra.mxu0 %v152
  %168 = vmatpush.bf16.msra.mxu0 %v151
  %169 = vmatpush.bf16.msra.mxu0 %v150
  %170 = vmatpush.bf16.msra.mxu0 %v149
  %171 = vmatpush.bf16.msra.mxu0 %v148
  %172 = vmatmul.bf16.gmra.mxu0 %v97
  %v173 = vpop.f32.mrf.mxu0
  %v174 = vadd.f32 %v114, %v173
  %v175 = vpop.f32.mrf.mxu0
  %v176 = vadd.f32 %v115, %v175
  %177 = vdwg.mxu0
  %v178 = vld [vmem:[%s9] sm:$0x1]
  %s179 = scalar_lea.vmem %s9, 1
  %v180 = vld [vmem:[%s179] sm:$0x1]
  %vm181 = vcmask 523264
  %v182 = vsel %vm181, %v174, 0.0
  %183 = vadd.xlane.f32.xlu0 %v182
  %v184 = vpop.xlane.xlu0 %183
  %v185 = vsel %vm181, %v176, 0.0
  %186 = vadd.xlane.f32.xlu0 %v185
  %v187 = vpop.xlane.xlu0 %186
  %v188 = vrcp.pop 64.0
  %v189 = vmul.f32 64.0, %v188
  %v190 = vsub.f32 1.0, %v189
  %v191 = vmul.f32 %v188, %v190
  %v192 = vadd.f32 %v188, %v191
  %vm193 = vweird.f32 %v188
  %v194 = vsel %vm193, %v188, %v192
  %v195 = vmul.f32 %v184, %v194
  %v196 = vmul.f32 %v187, %v194
  %v197 = vmul.f32 %v174, %v174
  %v198 = vmul.f32 %v176, %v176
  %v199 = vsel %vm181, %v197, 0.0
  %200 = vadd.xlane.f32.xlu0 %v199
  %v201 = vpop.xlane.xlu0 %200
  %v202 = vsel %vm181, %v198, 0.0
  %203 = vadd.xlane.f32.xlu0 %v202
  %v204 = vpop.xlane.xlu0 %203
  %v205 = vmul.f32 %v201, %v194
  %v206 = vmul.f32 %v204, %v194
  %v207 = vmul.f32 %v195, %v195
  %v208 = vmul.f32 %v196, %v196
  %v209 = vsub.f32 %v205, %v207
  %v210 = vsub.f32 %v206, %v208
  %v211 = vsub.f32 %v174, %v195
  %v212 = vsub.f32 %v176, %v196
  %v213 = vadd.f32 %v209, 1e-12
  %v214 = vadd.f32 %v210, 1e-12
  %v215 = vrsqrt.pop %v213
  %v216 = vmul.f32 %v215, %v213
  %v217 = vmul.f32 %v216, %v215
  %v218 = vmul.f32 0.5, %v217
  %v219 = vsub.f32 1.5, %v218
  %v220 = vmul.f32 %v215, %v219
  %vm221 = vweird.f32 %v213
  %vm222 = vweird.f32 %v215
  %vm223 = vmor %vm221, %vm222
  %v224 = vsel %vm223, %v215, %v220
  %v225 = vrsqrt.pop %v214
  %v226 = vmul.f32 %v225, %v214
  %v227 = vmul.f32 %v226, %v225
  %v228 = vmul.f32 0.5, %v227
  %v229 = vsub.f32 1.5, %v228
  %v230 = vmul.f32 %v225, %v229
  %vm231 = vweird.f32 %v214
  %vm232 = vweird.f32 %v225
  %vm233 = vmor %vm231, %vm232
  %v234 = vsel %vm233, %v225, %v230
  %v235 = vmul.f32 %v211, %v224
  %v236 = vmul.f32 %v212, %v234
  %v238 = vperm.slane %v178, 0
  %v240 = vmul.f32 %v235, %v238
  %v241 = vmul.f32 %v236, %v238
  %v243 = vperm.slane %v180, 0
  %v245 = vadd.f32 %v240, %v243
  %v246 = vadd.f32 %v241, %v243
  %v247 = vld [vmem:[%s2] sm:$0xf]
  %v248 = vld [vmem:[%s2 + $0x4] sm:$0xf]
  %v249 = vld [vmem:[%s2 + $0x8] sm:$0xf]
  %v250 = vld [vmem:[%s2 + $0xc] sm:$0xf]
  %v251 = vld [vmem:[%s2 + $0x10] sm:$0xf]
  %v252 = vld [vmem:[%s2 + $0x14] sm:$0xf]
  %v253 = vld [vmem:[%s2 + $0x18] sm:$0xf]
  %v254 = vld [vmem:[%s2 + $0x1c] sm:$0xf]
  %v255 = vld [vmem:[%s3] sm:$0xf]
  %v256 = vld [vmem:[%s3 + $0x4] sm:$0xf]
  %v257 = vld [vmem:[%s6] sm:$0xff]
  %v258 = vld [vmem:[%s6 + $0x8] sm:$0xff]
  %v259 = vld [vmem:[%s6 + $0x10] sm:$0xff]
  %v260 = vld [vmem:[%s6 + $0x18] sm:$0xff]
  %v261 = vld [vmem:[%s6 + $0x20] sm:$0xff]
  %v262 = vld [vmem:[%s6 + $0x28] sm:$0xff]
  %v263 = vld [vmem:[%s6 + $0x30] sm:$0xff]
  %v264 = vld [vmem:[%s6 + $0x38] sm:$0xff]
  %v265 = vld [vmem:[%s5] sm:$0xff]
  %v266 = vld [vmem:[%s5 + $0x8] sm:$0xff]
  %v267 = vld [vmem:[%s5 + $0x10] sm:$0xff]
  %v268 = vld [vmem:[%s5 + $0x18] sm:$0xff]
  %v269 = vld [vmem:[%s5 + $0x20] sm:$0xff]
  %v270 = vld [vmem:[%s5 + $0x28] sm:$0xff]
  %v271 = vld [vmem:[%s5 + $0x30] sm:$0xff]
  %v272 = vld [vmem:[%s5 + $0x38] sm:$0xff]
  %v273 = vld [vmem:[%s1] sm:$0x1]
  %v275 = vperm.slane %v273, 0
  %v277 = vmul.f32 %v265, %v275
  %v278 = vmul.f32 %v266, %v275
  %v279 = vmul.f32 %v267, %v275
  %v280 = vmul.f32 %v268, %v275
  %v281 = vmul.f32 %v269, %v275
  %v282 = vmul.f32 %v270, %v275
  %v283 = vmul.f32 %v271, %v275
  %v284 = vmul.f32 %v272, %v275
  %v285 = vsub.f32 %v277, 1.0
  %v286 = vsub.f32 %v278, 1.0
  %v287 = vsub.f32 %v279, 1.0
  %v288 = vsub.f32 %v280, 1.0
  %v289 = vsub.f32 %v281, 1.0
  %v290 = vsub.f32 %v282, 1.0
  %v291 = vsub.f32 %v283, 1.0
  %v292 = vsub.f32 %v284, 1.0
  %v293 = vmul.f32 %v285, 1e+09
  %v294 = vmul.f32 %v286, 1e+09
  %v295 = vmul.f32 %v287, 1e+09
  %v296 = vmul.f32 %v288, 1e+09
  %v297 = vmul.f32 %v289, 1e+09
  %v298 = vmul.f32 %v290, 1e+09
  %v299 = vmul.f32 %v291, 1e+09
  %v300 = vmul.f32 %v292, 1e+09
  %v301 = vpack.c.bf16 %v246, %v245
  %v302 = vld [vmem:[%s10] sm:$0xff]
  %v303 = vld [vmem:[%s10 + $0x8] sm:$0xff]
  %v304 = vld [vmem:[%s10 + $0x10] sm:$0xff]
  %v305 = vld [vmem:[%s10 + $0x18] sm:$0xff]
  %v306 = vld [vmem:[%s10 + $0x20] sm:$0xff]
  %v307 = vld [vmem:[%s10 + $0x28] sm:$0xff]
  %v308 = vld [vmem:[%s10 + $0x30] sm:$0xff]
  %v309 = vld [vmem:[%s10 + $0x38] sm:$0xff]
  %v310 = vld [vmem:[%s11] sm:$0x3]
  %v312 = vperm.slane %v310, 0
  %v313 = vperm.slane %v310, 1
  %v324 = vunpack.c.l.b16 %v302
  %v325 = vunpack.c.h.b16 %v302
  %v326 = vunpack.c.l.b16 %v303
  %v327 = vunpack.c.h.b16 %v303
  %v328 = vunpack.c.l.b16 %v304
  %v329 = vunpack.c.h.b16 %v304
  %v330 = vunpack.c.l.b16 %v305
  %v331 = vunpack.c.h.b16 %v305
  %v332 = vunpack.c.l.b16 %v306
  %v333 = vunpack.c.h.b16 %v306
  %v334 = vunpack.c.l.b16 %v307
  %v335 = vunpack.c.h.b16 %v307
  %v336 = vunpack.c.l.b16 %v308
  %v337 = vunpack.c.h.b16 %v308
  %v338 = vunpack.c.l.b16 %v309
  %v339 = vunpack.c.h.b16 %v309
  %v340 = vpack.c.b16 %v326, %v324
  %v341 = vpack.c.b16 %v327, %v325
  %v342 = vpack.c.b16 %v330, %v328
  %v343 = vpack.c.b16 %v331, %v329
  %v344 = vpack.c.b16 %v334, %v332
  %v345 = vpack.c.b16 %v335, %v333
  %v346 = vpack.c.b16 %v338, %v336
  %v347 = vpack.c.b16 %v339, %v337
  %v357 = vsel %vm181, %v301, 0
  %359 = vmatpush.bf16.msra.mxu0 0
  %360 = vmatpush.bf16.msra.mxu0 0
  %361 = vmatpush.bf16.msra.mxu0 0
  %362 = vmatpush.bf16.msra.mxu0 0
  %363 = vmatpush.bf16.msra.mxu0 %v346
  %364 = vmatpush.bf16.msra.mxu0 %v344
  %365 = vmatpush.bf16.msra.mxu0 %v342
  %366 = vmatpush.bf16.msra.mxu0 %v340
  %367 = vmatmul.bf16.gmra.mxu0 %v357
  %v368 = vpop.f32.mrf.mxu0
  %v369 = vadd.f32 %v312, %v368
  %v370 = vpop.f32.mrf.mxu0
  %v371 = vadd.f32 %v312, %v370
  %372 = vdwg.mxu0
  %373 = vmatpush.bf16.msra.mxu0 0
  %374 = vmatpush.bf16.msra.mxu0 0
  %375 = vmatpush.bf16.msra.mxu0 0
  %376 = vmatpush.bf16.msra.mxu0 0
  %377 = vmatpush.bf16.msra.mxu0 %v347
  %378 = vmatpush.bf16.msra.mxu0 %v345
  %379 = vmatpush.bf16.msra.mxu0 %v343
  %380 = vmatpush.bf16.msra.mxu0 %v341
  %381 = vmatmul.bf16.gmra.mxu0 %v357
  %v382 = vpop.f32.mrf.mxu0
  %v383 = vadd.f32 %v313, %v382
  %v384 = vpop.f32.mrf.mxu0
  %v385 = vadd.f32 %v313, %v384
  %386 = vdwg.mxu0
  %v387 = vpack.c.bf16 %v371, %v369
  %v396 = vunpack.c.l.b16 %v247
  %v397 = vunpack.c.l.b16 %v248
  %v398 = vunpack.c.l.b16 %v249
  %v399 = vunpack.c.l.b16 %v250
  %v400 = vunpack.c.l.b16 %v251
  %v401 = vunpack.c.l.b16 %v252
  %v402 = vunpack.c.l.b16 %v253
  %v403 = vunpack.c.l.b16 %v254
  %v404 = vpack.c.b16 %v397, %v396
  %v405 = vpack.c.b16 %v399, %v398
  %v406 = vpack.c.b16 %v401, %v400
  %v407 = vpack.c.b16 %v403, %v402
  %vm408 = vcmask 130048
  %v410 = vsel %vm408, %v404, 0
  %v413 = vsel %vm408, %v405, 0
  %v416 = vsel %vm408, %v406, 0
  %v419 = vsel %vm408, %v407, 0
  %421 = vmatpush.bf16.msra.mxu0 0
  %422 = vmatpush.bf16.msra.mxu0 0
  %423 = vmatpush.bf16.msra.mxu0 0
  %424 = vmatpush.bf16.msra.mxu0 0
  %425 = vmatpush.bf16.msra.mxu0 0
  %426 = vmatpush.bf16.msra.mxu0 0
  %427 = vmatpush.bf16.msra.mxu0 0
  %428 = vmatpush.bf16.msra.mxu0 %v387
  %429 = vmatmul.bf16.gmra.mxu0 %v410
  %v430 = vpop.f32.mrf.mxu0
  %v431 = vadd.f32 0.0, %v430
  %v432 = vpop.f32.mrf.mxu0
  %v433 = vadd.f32 0.0, %v432
  %434 = vmatmul.bf16.gmra.mxu0 %v413
  %v435 = vpop.f32.mrf.mxu0
  %v436 = vadd.f32 0.0, %v435
  %v437 = vpop.f32.mrf.mxu0
  %v438 = vadd.f32 0.0, %v437
  %439 = vmatmul.bf16.gmra.mxu0 %v416
  %v440 = vpop.f32.mrf.mxu0
  %v441 = vadd.f32 0.0, %v440
  %v442 = vpop.f32.mrf.mxu0
  %v443 = vadd.f32 0.0, %v442
  %444 = vmatmul.bf16.gmra.mxu0 %v419
  %v445 = vpop.f32.mrf.mxu0
  %v446 = vadd.f32 0.0, %v445
  %v447 = vpop.f32.mrf.mxu0
  %v448 = vadd.f32 0.0, %v447
  %449 = vdwg.mxu0
  %v450 = vmul.f32 %v431, %v257
  %v451 = vmul.f32 %v433, %v258
  %v452 = vmul.f32 %v436, %v259
  %v453 = vmul.f32 %v438, %v260
  %v454 = vmul.f32 %v441, %v261
  %v455 = vmul.f32 %v443, %v262
  %v456 = vmul.f32 %v446, %v263
  %v457 = vmul.f32 %v448, %v264
  %v458 = vpack.c.bf16 %v451, %v450
  %v459 = vpack.c.bf16 %v453, %v452
  %v460 = vpack.c.bf16 %v455, %v454
  %v461 = vpack.c.bf16 %v457, %v456
  %463 = vrot.lane.b32.xlu0 %v387, 64
  %v464 = vpop.permute.xlu0 %463
  %v466 = vsel %vm181, %v458, 0
  %v469 = vsel %vm181, %v459, 0
  %v472 = vsel %vm181, %v460, 0
  %v475 = vsel %vm181, %v461, 0
  %v478 = vsel %vm181, %v464, 0
  %480 = vmatpush.bf16.xpose.msra.mxu0 0
  %481 = vmatpush.bf16.xpose.msra.mxu0 0
  %482 = vmatpush.bf16.xpose.msra.mxu0 0
  %483 = vmatpush.bf16.xpose.msra.mxu0 0
  %484 = vmatpush.bf16.xpose.msra.mxu0 0
  %485 = vmatpush.bf16.xpose.msra.mxu0 0
  %486 = vmatpush.bf16.xpose.msra.mxu0 0
  %487 = vmatpush.bf16.xpose.msra.mxu0 %v478
  %488 = vmatmul.bf16.gmra.mxu0 %v466
  %v489 = vpop.f32.mrf.mxu0
  %v490 = vadd.f32 %v293, %v489
  %v491 = vpop.f32.mrf.mxu0
  %v492 = vadd.f32 %v294, %v491
  %493 = vmatmul.bf16.gmra.mxu0 %v469
  %v494 = vpop.f32.mrf.mxu0
  %v495 = vadd.f32 %v295, %v494
  %v496 = vpop.f32.mrf.mxu0
  %v497 = vadd.f32 %v296, %v496
  %498 = vmatmul.bf16.gmra.mxu0 %v472
  %v499 = vpop.f32.mrf.mxu0
  %v500 = vadd.f32 %v297, %v499
  %v501 = vpop.f32.mrf.mxu0
  %v502 = vadd.f32 %v298, %v501
  %503 = vmatmul.bf16.gmra.mxu0 %v475
  %v504 = vpop.f32.mrf.mxu0
  %v505 = vadd.f32 %v299, %v504
  %v506 = vpop.f32.mrf.mxu0
  %v507 = vadd.f32 %v300, %v506
  %508 = vdwg.mxu0
  %v509 = vsel %vm408, %v490, -inf
  %510 = vmax.xlane.f32.xlu0 %v509
  %v511 = vpop.xlane.xlu0 %510
  %v512 = vsel %vm408, %v492, -inf
  %513 = vmax.xlane.f32.xlu0 %v512
  %v514 = vpop.xlane.xlu0 %513
  %v515 = vsel %vm408, %v495, -inf
  %516 = vmax.xlane.f32.xlu0 %v515
  %v517 = vpop.xlane.xlu0 %516
  %v518 = vsel %vm408, %v497, -inf
  %519 = vmax.xlane.f32.xlu0 %v518
  %v520 = vpop.xlane.xlu0 %519
  %v521 = vsel %vm408, %v500, -inf
  %522 = vmax.xlane.f32.xlu0 %v521
  %v523 = vpop.xlane.xlu0 %522
  %v524 = vsel %vm408, %v502, -inf
  %525 = vmax.xlane.f32.xlu0 %v524
  %v526 = vpop.xlane.xlu0 %525
  %v527 = vsel %vm408, %v505, -inf
  %528 = vmax.xlane.f32.xlu0 %v527
  %v529 = vpop.xlane.xlu0 %528
  %v530 = vsel %vm408, %v507, -inf
  %531 = vmax.xlane.f32.xlu0 %v530
  %v532 = vpop.xlane.xlu0 %531
  %v533 = vsub.f32 %v490, %v511
  %v534 = vsub.f32 %v492, %v514
  %v535 = vsub.f32 %v495, %v517
  %v536 = vsub.f32 %v497, %v520
  %v537 = vsub.f32 %v500, %v523
  %v538 = vsub.f32 %v502, %v526
  %v539 = vsub.f32 %v505, %v529
  %v540 = vsub.f32 %v507, %v532
  %v541 = vmul.f32 %v533, 1.442695
  %v542 = vpow.pop %v541
  %v543 = vmul.f32 %v534, 1.442695
  %v544 = vpow.pop %v543
  %v545 = vmul.f32 %v535, 1.442695
  %v546 = vpow.pop %v545
  %v547 = vmul.f32 %v536, 1.442695
  %v548 = vpow.pop %v547
  %v549 = vmul.f32 %v537, 1.442695
  %v550 = vpow.pop %v549
  %v551 = vmul.f32 %v538, 1.442695
  %v552 = vpow.pop %v551
  %v553 = vmul.f32 %v539, 1.442695
  %v554 = vpow.pop %v553
  %v555 = vmul.f32 %v540, 1.442695
  %v556 = vpow.pop %v555
  %v557 = vsel %vm408, %v542, 0.0
  %558 = vadd.xlane.f32.xlu0 %v557
  %v559 = vpop.xlane.xlu0 %558
  %v560 = vsel %vm408, %v544, 0.0
  %561 = vadd.xlane.f32.xlu0 %v560
  %v562 = vpop.xlane.xlu0 %561
  %v563 = vsel %vm408, %v546, 0.0
  %564 = vadd.xlane.f32.xlu0 %v563
  %v565 = vpop.xlane.xlu0 %564
  %v566 = vsel %vm408, %v548, 0.0
  %567 = vadd.xlane.f32.xlu0 %v566
  %v568 = vpop.xlane.xlu0 %567
  %v569 = vsel %vm408, %v550, 0.0
  %570 = vadd.xlane.f32.xlu0 %v569
  %v571 = vpop.xlane.xlu0 %570
  %v572 = vsel %vm408, %v552, 0.0
  %573 = vadd.xlane.f32.xlu0 %v572
  %v574 = vpop.xlane.xlu0 %573
  %v575 = vsel %vm408, %v554, 0.0
  %576 = vadd.xlane.f32.xlu0 %v575
  %v577 = vpop.xlane.xlu0 %576
  %v578 = vsel %vm408, %v556, 0.0
  %579 = vadd.xlane.f32.xlu0 %v578
  %v580 = vpop.xlane.xlu0 %579
  %v581 = vrcp.pop %v559
  %v582 = vrcp.pop %v562
  %v583 = vrcp.pop %v565
  %v584 = vrcp.pop %v568
  %v585 = vrcp.pop %v571
  %v586 = vrcp.pop %v574
  %v587 = vrcp.pop %v577
  %v588 = vrcp.pop %v580
  %v589 = vmul.f32 %v542, %v581
  %v590 = vmul.f32 %v544, %v582
  %v591 = vmul.f32 %v546, %v583
  %v592 = vmul.f32 %v548, %v584
  %v593 = vmul.f32 %v550, %v585
  %v594 = vmul.f32 %v552, %v586
  %v595 = vmul.f32 %v554, %v587
  %v596 = vmul.f32 %v556, %v588
  %v597 = vpack.c.bf16 %v590, %v589
  %v598 = vpack.c.bf16 %v592, %v591
  %v599 = vpack.c.bf16 %v594, %v593
  %v600 = vpack.c.bf16 %v596, %v595
  %v601 = vpack.c.bf16 %v385, %v383
  %v603 = vsel %vm408, %v597, 0
  %v606 = vsel %vm408, %v598, 0
  %v609 = vsel %vm408, %v599, 0
  %v612 = vsel %vm408, %v600, 0
  %614 = vmatpush.bf16.msra.mxu0 0
  %615 = vmatpush.bf16.msra.mxu0 0
  %616 = vmatpush.bf16.msra.mxu0 0
  %617 = vmatpush.bf16.msra.mxu0 0
  %618 = vmatpush.bf16.msra.mxu0 0
  %619 = vmatpush.bf16.msra.mxu0 0
  %620 = vmatpush.bf16.msra.mxu0 0
  %621 = vmatpush.bf16.msra.mxu0 %v601
  %622 = vmatmul.bf16.gmra.mxu0 %v603
  %v623 = vpop.f32.mrf.mxu0
  %v624 = vadd.f32 0.0, %v623
  %v625 = vpop.f32.mrf.mxu0
  %v626 = vadd.f32 0.0, %v625
  %627 = vmatmul.bf16.gmra.mxu0 %v606
  %v628 = vpop.f32.mrf.mxu0
  %v629 = vadd.f32 0.0, %v628
  %v630 = vpop.f32.mrf.mxu0
  %v631 = vadd.f32 0.0, %v630
  %632 = vmatmul.bf16.gmra.mxu0 %v609
  %v633 = vpop.f32.mrf.mxu0
  %v634 = vadd.f32 0.0, %v633
  %v635 = vpop.f32.mrf.mxu0
  %v636 = vadd.f32 0.0, %v635
  %637 = vmatmul.bf16.gmra.mxu0 %v612
  %v638 = vpop.f32.mrf.mxu0
  %v639 = vadd.f32 0.0, %v638
  %v640 = vpop.f32.mrf.mxu0
  %v641 = vadd.f32 0.0, %v640
  %642 = vdwg.mxu0
  %v643 = vmul.f32 %v624, %v257
  %v644 = vmul.f32 %v626, %v258
  %v645 = vmul.f32 %v629, %v259
  %v646 = vmul.f32 %v631, %v260
  %v647 = vmul.f32 %v634, %v261
  %v648 = vmul.f32 %v636, %v262
  %v649 = vmul.f32 %v639, %v263
  %v650 = vmul.f32 %v641, %v264
  %v651 = vpack.c.bf16 %v644, %v643
  %v652 = vpack.c.bf16 %v646, %v645
  %v653 = vpack.c.bf16 %v648, %v647
  %v654 = vpack.c.bf16 %v650, %v649
  %v657 = vunpack.c.l.b16 %v255
  %v658 = vunpack.c.l.b16 %v256
  %v659 = vpack.c.b16 %v658, %v657
  %v661 = vsel %vm181, %v659, 0
  %663 = vmatpush.bf16.msra.mxu0 0
  %664 = vmatpush.bf16.msra.mxu0 0
  %665 = vmatpush.bf16.msra.mxu0 0
  %666 = vmatpush.bf16.msra.mxu0 0
  %667 = vmatpush.bf16.msra.mxu0 %v654
  %668 = vmatpush.bf16.msra.mxu0 %v653
  %669 = vmatpush.bf16.msra.mxu0 %v652
  %670 = vmatpush.bf16.msra.mxu0 %v651
  %671 = vmatmul.bf16.gmra.mxu0 %v661
  %v672 = vpop.f32.mrf.mxu0
  %v673 = vadd.f32 0.0, %v672
  %v674 = vpop.f32.mrf.mxu0
  %v675 = vadd.f32 0.0, %v674
  %676 = vdwg.mxu0
  %v677 = vpack.c.bf16 %v675, %v673
  %v678 = vld [vmem:[%s12] sm:$0xf]
  %v679 = vld [vmem:[%s12 + $0x4] sm:$0xf]
  %v680 = vld [vmem:[%s12 + $0x8] sm:$0xf]
  %v681 = vld [vmem:[%s12 + $0xc] sm:$0xf]
  %v682 = vld [vmem:[%s12 + $0x10] sm:$0xf]
  %v683 = vld [vmem:[%s12 + $0x14] sm:$0xf]
  %v684 = vld [vmem:[%s12 + $0x18] sm:$0xf]
  %v685 = vld [vmem:[%s12 + $0x1c] sm:$0xf]
  %v686 = vld [vmem:[%s13] sm:$0x1]
  %v688 = vperm.slane %v686, 0
  %v698 = vunpack.c.l.b16 %v678
  %v699 = vunpack.c.l.b16 %v679
  %v700 = vunpack.c.l.b16 %v680
  %v701 = vunpack.c.l.b16 %v681
  %v702 = vunpack.c.l.b16 %v682
  %v703 = vunpack.c.l.b16 %v683
  %v704 = vunpack.c.l.b16 %v684
  %v705 = vunpack.c.l.b16 %v685
  %v706 = vpack.c.b16 %v699, %v698
  %v707 = vpack.c.b16 %v701, %v700
  %v708 = vpack.c.b16 %v703, %v702
  %v709 = vpack.c.b16 %v705, %v704
  %v715 = vsel %vm181, %v677, 0
  %717 = vmatpush.bf16.msra.mxu0 0
  %718 = vmatpush.bf16.msra.mxu0 0
  %719 = vmatpush.bf16.msra.mxu0 0
  %720 = vmatpush.bf16.msra.mxu0 0
  %721 = vmatpush.bf16.msra.mxu0 %v709
  %722 = vmatpush.bf16.msra.mxu0 %v708
  %723 = vmatpush.bf16.msra.mxu0 %v707
  %724 = vmatpush.bf16.msra.mxu0 %v706
  %725 = vmatmul.bf16.gmra.mxu0 %v715
  %v726 = vpop.f32.mrf.mxu0
  %v727 = vadd.f32 %v688, %v726
  %v728 = vpop.f32.mrf.mxu0
  %v729 = vadd.f32 %v688, %v728
  %730 = vdwg.mxu0
  %v731 = vadd.f32 %v245, %v727
  %v732 = vadd.f32 %v246, %v729
  %v733 = vld [vmem:[%s14] sm:$0x1]
  %s734 = scalar_lea.vmem %s14, 1
  %v735 = vld [vmem:[%s734] sm:$0x1]
  %v736 = vsel %vm181, %v731, 0.0
  %737 = vadd.xlane.f32.xlu0 %v736
  %v738 = vpop.xlane.xlu0 %737
  %v739 = vsel %vm181, %v732, 0.0
  %740 = vadd.xlane.f32.xlu0 %v739
  %v741 = vpop.xlane.xlu0 %740
  %v742 = vmul.f32 %v738, %v194
  %v743 = vmul.f32 %v741, %v194
  %v744 = vmul.f32 %v731, %v731
  %v745 = vmul.f32 %v732, %v732
  %v746 = vsel %vm181, %v744, 0.0
  %747 = vadd.xlane.f32.xlu0 %v746
  %v748 = vpop.xlane.xlu0 %747
  %v749 = vsel %vm181, %v745, 0.0
  %750 = vadd.xlane.f32.xlu0 %v749
  %v751 = vpop.xlane.xlu0 %750
  %v752 = vmul.f32 %v748, %v194
  %v753 = vmul.f32 %v751, %v194
  %v754 = vmul.f32 %v742, %v742
  %v755 = vmul.f32 %v743, %v743
  %v756 = vsub.f32 %v752, %v754
  %v757 = vsub.f32 %v753, %v755
  %v758 = vsub.f32 %v731, %v742
  %v759 = vsub.f32 %v732, %v743
  %v760 = vadd.f32 %v756, 1e-12
  %v761 = vadd.f32 %v757, 1e-12
  %v762 = vrsqrt.pop %v760
  %v763 = vmul.f32 %v762, %v760
  %v764 = vmul.f32 %v763, %v762
  %v765 = vmul.f32 0.5, %v764
  %v766 = vsub.f32 1.5, %v765
  %v767 = vmul.f32 %v762, %v766
  %vm768 = vweird.f32 %v760
  %vm769 = vweird.f32 %v762
  %vm770 = vmor %vm768, %vm769
  %v771 = vsel %vm770, %v762, %v767
  %v772 = vrsqrt.pop %v761
  %v773 = vmul.f32 %v772, %v761
  %v774 = vmul.f32 %v773, %v772
  %v775 = vmul.f32 0.5, %v774
  %v776 = vsub.f32 1.5, %v775
  %v777 = vmul.f32 %v772, %v776
  %vm778 = vweird.f32 %v761
  %vm779 = vweird.f32 %v772
  %vm780 = vmor %vm778, %vm779
  %v781 = vsel %vm780, %v772, %v777
  %v782 = vmul.f32 %v758, %v771
  %v783 = vmul.f32 %v759, %v781
  %v785 = vperm.slane %v733, 0
  %v787 = vmul.f32 %v782, %v785
  %v788 = vmul.f32 %v783, %v785
  %v790 = vperm.slane %v735, 0
  %v792 = vadd.f32 %v787, %v790
  %v793 = vadd.f32 %v788, %v790
  %v794 = vpack.c.bf16 %v793, %v792
  %v795 = vld [vmem:[%s15] sm:$0xff]
  %v796 = vld [vmem:[%s15 + $0x8] sm:$0xff]
  %v797 = vld [vmem:[%s15 + $0x10] sm:$0xff]
  %v798 = vld [vmem:[%s15 + $0x18] sm:$0xff]
  %v799 = vld [vmem:[%s15 + $0x20] sm:$0xff]
  %v800 = vld [vmem:[%s15 + $0x28] sm:$0xff]
  %v801 = vld [vmem:[%s15 + $0x30] sm:$0xff]
  %v802 = vld [vmem:[%s15 + $0x38] sm:$0xff]
  %v803 = vld [vmem:[%s16] sm:$0x3]
  %v805 = vperm.slane %v803, 0
  %v806 = vperm.slane %v803, 1
  %v817 = vunpack.c.l.b16 %v795
  %v818 = vunpack.c.h.b16 %v795
  %v819 = vunpack.c.l.b16 %v796
  %v820 = vunpack.c.h.b16 %v796
  %v821 = vunpack.c.l.b16 %v797
  %v822 = vunpack.c.h.b16 %v797
  %v823 = vunpack.c.l.b16 %v798
  %v824 = vunpack.c.h.b16 %v798
  %v825 = vunpack.c.l.b16 %v799
  %v826 = vunpack.c.h.b16 %v799
  %v827 = vunpack.c.l.b16 %v800
  %v828 = vunpack.c.h.b16 %v800
  %v829 = vunpack.c.l.b16 %v801
  %v830 = vunpack.c.h.b16 %v801
  %v831 = vunpack.c.l.b16 %v802
  %v832 = vunpack.c.h.b16 %v802
  %v833 = vpack.c.b16 %v819, %v817
  %v834 = vpack.c.b16 %v820, %v818
  %v835 = vpack.c.b16 %v823, %v821
  %v836 = vpack.c.b16 %v824, %v822
  %v837 = vpack.c.b16 %v827, %v825
  %v838 = vpack.c.b16 %v828, %v826
  %v839 = vpack.c.b16 %v831, %v829
  %v840 = vpack.c.b16 %v832, %v830
  %v850 = vsel %vm181, %v794, 0
  %852 = vmatpush.bf16.msra.mxu0 0
  %853 = vmatpush.bf16.msra.mxu0 0
  %854 = vmatpush.bf16.msra.mxu0 0
  %855 = vmatpush.bf16.msra.mxu0 0
  %856 = vmatpush.bf16.msra.mxu0 %v839
  %857 = vmatpush.bf16.msra.mxu0 %v837
  %858 = vmatpush.bf16.msra.mxu0 %v835
  %859 = vmatpush.bf16.msra.mxu0 %v833
  %860 = vmatmul.bf16.gmra.mxu0 %v850
  %v861 = vpop.f32.mrf.mxu0
  %v862 = vadd.f32 %v805, %v861
  %v863 = vpop.f32.mrf.mxu0
  %v864 = vadd.f32 %v805, %v863
  %865 = vdwg.mxu0
  %866 = vmatpush.bf16.msra.mxu0 0
  %867 = vmatpush.bf16.msra.mxu0 0
  %868 = vmatpush.bf16.msra.mxu0 0
  %869 = vmatpush.bf16.msra.mxu0 0
  %870 = vmatpush.bf16.msra.mxu0 %v840
  %871 = vmatpush.bf16.msra.mxu0 %v838
  %872 = vmatpush.bf16.msra.mxu0 %v836
  %873 = vmatpush.bf16.msra.mxu0 %v834
  %874 = vmatmul.bf16.gmra.mxu0 %v850
  %v875 = vpop.f32.mrf.mxu0
  %v876 = vadd.f32 %v806, %v875
  %v877 = vpop.f32.mrf.mxu0
  %v878 = vadd.f32 %v806, %v877
  %879 = vdwg.mxu0
  %v880 = vmul.f32 %v862, %v862
  %v881 = vmul.f32 %v876, %v876
  %v882 = vmul.f32 %v864, %v864
  %v883 = vmul.f32 %v878, %v878
  %v884 = vmul.f32 %v862, %v880
  %v885 = vmul.f32 %v876, %v881
  %v886 = vmul.f32 %v864, %v882
  %v887 = vmul.f32 %v878, %v883
  %v888 = vmul.f32 %v884, 0.044715
  %v889 = vmul.f32 %v885, 0.044715
  %v890 = vmul.f32 %v886, 0.044715
  %v891 = vmul.f32 %v887, 0.044715
  %v892 = vadd.f32 %v862, %v888
  %v893 = vadd.f32 %v876, %v889
  %v894 = vadd.f32 %v864, %v890
  %v895 = vadd.f32 %v878, %v891
  %v896 = vmul.f32 %v892, 0.7978846
  %v897 = vmul.f32 %v893, 0.7978846
  %v898 = vmul.f32 %v894, 0.7978846
  %v899 = vmul.f32 %v895, 0.7978846
  %v900 = vtanh.pop %v896
  %v901 = vtanh.pop %v897
  %v902 = vtanh.pop %v898
  %v903 = vtanh.pop %v899
  %v904 = vadd.f32 %v900, 1.0
  %v905 = vadd.f32 %v901, 1.0
  %v906 = vadd.f32 %v902, 1.0
  %v907 = vadd.f32 %v903, 1.0
  %v908 = vmul.f32 %v904, 0.5
  %v909 = vmul.f32 %v905, 0.5
  %v910 = vmul.f32 %v906, 0.5
  %v911 = vmul.f32 %v907, 0.5
  %v912 = vmul.f32 %v862, %v908
  %v913 = vmul.f32 %v876, %v909
  %v914 = vmul.f32 %v864, %v910
  %v915 = vmul.f32 %v878, %v911
  %v916 = vpack.c.bf16 %v914, %v912
  %v917 = vpack.c.bf16 %v915, %v913
  %v918 = vld [vmem:[%s17] sm:$0xf]
  %v919 = vld [vmem:[%s17 + $0x4] sm:$0xf]
  %v920 = vld [vmem:[%s17 + $0x8] sm:$0xf]
  %v921 = vld [vmem:[%s17 + $0xc] sm:$0xf]
  %v922 = vld [vmem:[%s17 + $0x10] sm:$0xf]
  %v923 = vld [vmem:[%s17 + $0x14] sm:$0xf]
  %v924 = vld [vmem:[%s17 + $0x18] sm:$0xf]
  %v925 = vld [vmem:[%s17 + $0x1c] sm:$0xf]
  %v926 = vld [vmem:[%s17 + $0x20] sm:$0xf]
  %v927 = vld [vmem:[%s17 + $0x24] sm:$0xf]
  %v928 = vld [vmem:[%s17 + $0x28] sm:$0xf]
  %v929 = vld [vmem:[%s17 + $0x2c] sm:$0xf]
  %v930 = vld [vmem:[%s17 + $0x30] sm:$0xf]
  %v931 = vld [vmem:[%s17 + $0x34] sm:$0xf]
  %v932 = vld [vmem:[%s17 + $0x38] sm:$0xf]
  %v933 = vld [vmem:[%s17 + $0x3c] sm:$0xf]
  %v934 = vld [vmem:[%s17 + $0x40] sm:$0xf]
  %v935 = vld [vmem:[%s17 + $0x44] sm:$0xf]
  %v936 = vld [vmem:[%s17 + $0x48] sm:$0xf]
  %v937 = vld [vmem:[%s17 + $0x4c] sm:$0xf]
  %v938 = vld [vmem:[%s17 + $0x50] sm:$0xf]
  %v939 = vld [vmem:[%s17 + $0x54] sm:$0xf]
  %v940 = vld [vmem:[%s17 + $0x58] sm:$0xf]
  %v941 = vld [vmem:[%s17 + $0x5c] sm:$0xf]
  %v942 = vld [vmem:[%s17 + $0x60] sm:$0xf]
  %v943 = vld [vmem:[%s17 + $0x64] sm:$0xf]
  %v944 = vld [vmem:[%s17 + $0x68] sm:$0xf]
  %v945 = vld [vmem:[%s17 + $0x6c] sm:$0xf]
  %v946 = vld [vmem:[%s17 + $0x70] sm:$0xf]
  %v947 = vld [vmem:[%s17 + $0x74] sm:$0xf]
  %v948 = vld [vmem:[%s17 + $0x78] sm:$0xf]
  %v949 = vld [vmem:[%s17 + $0x7c] sm:$0xf]
  %v950 = vld [vmem:[%s18] sm:$0x1]
  %v952 = vperm.slane %v950, 0
  %v986 = vunpack.c.l.b16 %v918
  %v987 = vunpack.c.l.b16 %v919
  %v988 = vunpack.c.l.b16 %v920
  %v989 = vunpack.c.l.b16 %v921
  %v990 = vunpack.c.l.b16 %v922
  %v991 = vunpack.c.l.b16 %v923
  %v992 = vunpack.c.l.b16 %v924
  %v993 = vunpack.c.l.b16 %v925
  %v994 = vunpack.c.l.b16 %v926
  %v995 = vunpack.c.l.b16 %v927
  %v996 = vunpack.c.l.b16 %v928
  %v997 = vunpack.c.l.b16 %v929
  %v998 = vunpack.c.l.b16 %v930
  %v999 = vunpack.c.l.b16 %v931
  %v1000 = vunpack.c.l.b16 %v932
  %v1001 = vunpack.c.l.b16 %v933
  %v1002 = vunpack.c.l.b16 %v934
  %v1003 = vunpack.c.l.b16 %v935
  %v1004 = vunpack.c.l.b16 %v936
  %v1005 = vunpack.c.l.b16 %v937
  %v1006 = vunpack.c.l.b16 %v938
  %v1007 = vunpack.c.l.b16 %v939
  %v1008 = vunpack.c.l.b16 %v940
  %v1009 = vunpack.c.l.b16 %v941
  %v1010 = vunpack.c.l.b16 %v942
  %v1011 = vunpack.c.l.b16 %v943
  %v1012 = vunpack.c.l.b16 %v944
  %v1013 = vunpack.c.l.b16 %v945
  %v1014 = vunpack.c.l.b16 %v946
  %v1015 = vunpack.c.l.b16 %v947
  %v1016 = vunpack.c.l.b16 %v948
  %v1017 = vunpack.c.l.b16 %v949
  %v1018 = vpack.c.b16 %v987, %v986
  %v1019 = vpack.c.b16 %v989, %v988
  %v1020 = vpack.c.b16 %v991, %v990
  %v1021 = vpack.c.b16 %v993, %v992
  %v1022 = vpack.c.b16 %v995, %v994
  %v1023 = vpack.c.b16 %v997, %v996
  %v1024 = vpack.c.b16 %v999, %v998
  %v1025 = vpack.c.b16 %v1001, %v1000
  %v1026 = vpack.c.b16 %v1003, %v1002
  %v1027 = vpack.c.b16 %v1005, %v1004
  %v1028 = vpack.c.b16 %v1007, %v1006
  %v1029 = vpack.c.b16 %v1009, %v1008
  %v1030 = vpack.c.b16 %v1011, %v1010
  %v1031 = vpack.c.b16 %v1013, %v1012
  %v1032 = vpack.c.b16 %v1015, %v1014
  %v1033 = vpack.c.b16 %v1017, %v1016
  %1050 = vmatpush.bf16.msra.mxu0 %v1025
  %1051 = vmatpush.bf16.msra.mxu0 %v1024
  %1052 = vmatpush.bf16.msra.mxu0 %v1023
  %1053 = vmatpush.bf16.msra.mxu0 %v1022
  %1054 = vmatpush.bf16.msra.mxu0 %v1021
  %1055 = vmatpush.bf16.msra.mxu0 %v1020
  %1056 = vmatpush.bf16.msra.mxu0 %v1019
  %1057 = vmatpush.bf16.msra.mxu0 %v1018
  %1058 = vmatmul.bf16.gmra.mxu0 %v916
  %v1059 = vpop.f32.mrf.mxu0
  %v1060 = vadd.f32 %v952, %v1059
  %v1061 = vpop.f32.mrf.mxu0
  %v1062 = vadd.f32 %v952, %v1061
  %1063 = vdwg.mxu0
  %1064 = vmatpush.bf16.msra.mxu0 %v1033
  %1065 = vmatpush.bf16.msra.mxu0 %v1032
  %1066 = vmatpush.bf16.msra.mxu0 %v1031
  %1067 = vmatpush.bf16.msra.mxu0 %v1030
  %1068 = vmatpush.bf16.msra.mxu0 %v1029
  %1069 = vmatpush.bf16.msra.mxu0 %v1028
  %1070 = vmatpush.bf16.msra.mxu0 %v1027
  %1071 = vmatpush.bf16.msra.mxu0 %v1026
  %1072 = vmatmul.bf16.gmra.mxu0 %v917
  %v1073 = vpop.f32.mrf.mxu0
  %v1074 = vadd.f32 %v1060, %v1073
  %v1075 = vpop.f32.mrf.mxu0
  %v1076 = vadd.f32 %v1062, %v1075
  %1077 = vdwg.mxu0
  %v1078 = vadd.f32 %v792, %v1074
  %v1079 = vadd.f32 %v793, %v1076
  %s1080 = scalar_lea.vmem %s14, 2
  %v1081 = vld [vmem:[%s1080] sm:$0x1]
  %s1082 = scalar_lea.vmem %s14, 3
  %v1083 = vld [vmem:[%s1082] sm:$0x1]
  %v1084 = vsel %vm181, %v1078, 0.0
  %1085 = vadd.xlane.f32.xlu0 %v1084
  %v1086 = vpop.xlane.xlu0 %1085
  %v1087 = vsel %vm181, %v1079, 0.0
  %1088 = vadd.xlane.f32.xlu0 %v1087
  %v1089 = vpop.xlane.xlu0 %1088
  %v1090 = vmul.f32 %v1086, %v194
  %v1091 = vmul.f32 %v1089, %v194
  %v1092 = vmul.f32 %v1078, %v1078
  %v1093 = vmul.f32 %v1079, %v1079
  %v1094 = vsel %vm181, %v1092, 0.0
  %1095 = vadd.xlane.f32.xlu0 %v1094
  %v1096 = vpop.xlane.xlu0 %1095
  %v1097 = vsel %vm181, %v1093, 0.0
  %1098 = vadd.xlane.f32.xlu0 %v1097
  %v1099 = vpop.xlane.xlu0 %1098
  %v1100 = vmul.f32 %v1096, %v194
  %v1101 = vmul.f32 %v1099, %v194
  %v1102 = vmul.f32 %v1090, %v1090
  %v1103 = vmul.f32 %v1091, %v1091
  %v1104 = vsub.f32 %v1100, %v1102
  %v1105 = vsub.f32 %v1101, %v1103
  %v1106 = vsub.f32 %v1078, %v1090
  %v1107 = vsub.f32 %v1079, %v1091
  %v1108 = vadd.f32 %v1104, 1e-12
  %v1109 = vadd.f32 %v1105, 1e-12
  %v1110 = vrsqrt.pop %v1108
  %v1111 = vmul.f32 %v1110, %v1108
  %v1112 = vmul.f32 %v1111, %v1110
  %v1113 = vmul.f32 0.5, %v1112
  %v1114 = vsub.f32 1.5, %v1113
  %v1115 = vmul.f32 %v1110, %v1114
  %vm1116 = vweird.f32 %v1108
  %vm1117 = vweird.f32 %v1110
  %vm1118 = vmor %vm1116, %vm1117
  %v1119 = vsel %vm1118, %v1110, %v1115
  %v1120 = vrsqrt.pop %v1109
  %v1121 = vmul.f32 %v1120, %v1109
  %v1122 = vmul.f32 %v1121, %v1120
  %v1123 = vmul.f32 0.5, %v1122
  %v1124 = vsub.f32 1.5, %v1123
  %v1125 = vmul.f32 %v1120, %v1124
  %vm1126 = vweird.f32 %v1109
  %vm1127 = vweird.f32 %v1120
  %vm1128 = vmor %vm1126, %vm1127
  %v1129 = vsel %vm1128, %v1120, %v1125
  %v1130 = vmul.f32 %v1106, %v1119
  %v1131 = vmul.f32 %v1107, %v1129
  %v1133 = vperm.slane %v1081, 0
  %v1135 = vmul.f32 %v1130, %v1133
  %v1136 = vmul.f32 %v1131, %v1133
  %v1138 = vperm.slane %v1083, 0
  %v1140 = vadd.f32 %v1135, %v1138
  %v1141 = vadd.f32 %v1136, %v1138
  %v1142 = vpack.c.bf16 %v1141, %v1140
  %s1143 = scalar_lea.vmem %s10, 64
  %v1144 = vld [vmem:[%s1143] sm:$0xff]
  %v1145 = vld [vmem:[%s1143 + $0x8] sm:$0xff]
  %v1146 = vld [vmem:[%s1143 + $0x10] sm:$0xff]
  %v1147 = vld [vmem:[%s1143 + $0x18] sm:$0xff]
  %v1148 = vld [vmem:[%s1143 + $0x20] sm:$0xff]
  %v1149 = vld [vmem:[%s1143 + $0x28] sm:$0xff]
  %v1150 = vld [vmem:[%s1143 + $0x30] sm:$0xff]
  %v1151 = vld [vmem:[%s1143 + $0x38] sm:$0xff]
  %s1152 = scalar_lea.vmem %s11, 2
  %v1153 = vld [vmem:[%s1152] sm:$0x3]
  %v1155 = vperm.slane %v1153, 0
  %v1156 = vperm.slane %v1153, 1
  %v1167 = vunpack.c.l.b16 %v1144
  %v1168 = vunpack.c.h.b16 %v1144
  %v1169 = vunpack.c.l.b16 %v1145
  %v1170 = vunpack.c.h.b16 %v1145
  %v1171 = vunpack.c.l.b16 %v1146
  %v1172 = vunpack.c.h.b16 %v1146
  %v1173 = vunpack.c.l.b16 %v1147
  %v1174 = vunpack.c.h.b16 %v1147
  %v1175 = vunpack.c.l.b16 %v1148
  %v1176 = vunpack.c.h.b16 %v1148
  %v1177 = vunpack.c.l.b16 %v1149
  %v1178 = vunpack.c.h.b16 %v1149
  %v1179 = vunpack.c.l.b16 %v1150
  %v1180 = vunpack.c.h.b16 %v1150
  %v1181 = vunpack.c.l.b16 %v1151
  %v1182 = vunpack.c.h.b16 %v1151
  %v1183 = vpack.c.b16 %v1169, %v1167
  %v1184 = vpack.c.b16 %v1170, %v1168
  %v1185 = vpack.c.b16 %v1173, %v1171
  %v1186 = vpack.c.b16 %v1174, %v1172
  %v1187 = vpack.c.b16 %v1177, %v1175
  %v1188 = vpack.c.b16 %v1178, %v1176
  %v1189 = vpack.c.b16 %v1181, %v1179
  %v1190 = vpack.c.b16 %v1182, %v1180
  %v1200 = vsel %vm181, %v1142, 0
  %1202 = vmatpush.bf16.msra.mxu0 0
  %1203 = vmatpush.bf16.msra.mxu0 0
  %1204 = vmatpush.bf16.msra.mxu0 0
  %1205 = vmatpush.bf16.msra.mxu0 0
  %1206 = vmatpush.bf16.msra.mxu0 %v1189
  %1207 = vmatpush.bf16.msra.mxu0 %v1187
  %1208 = vmatpush.bf16.msra.mxu0 %v1185
  %1209 = vmatpush.bf16.msra.mxu0 %v1183
  %1210 = vmatmul.bf16.gmra.mxu0 %v1200
  %v1211 = vpop.f32.mrf.mxu0
  %v1212 = vadd.f32 %v1155, %v1211
  %v1213 = vpop.f32.mrf.mxu0
  %v1214 = vadd.f32 %v1155, %v1213
  %1215 = vdwg.mxu0
  %1216 = vmatpush.bf16.msra.mxu0 0
  %1217 = vmatpush.bf16.msra.mxu0 0
  %1218 = vmatpush.bf16.msra.mxu0 0
  %1219 = vmatpush.bf16.msra.mxu0 0
  %1220 = vmatpush.bf16.msra.mxu0 %v1190
  %1221 = vmatpush.bf16.msra.mxu0 %v1188
  %1222 = vmatpush.bf16.msra.mxu0 %v1186
  %1223 = vmatpush.bf16.msra.mxu0 %v1184
  %1224 = vmatmul.bf16.gmra.mxu0 %v1200
  %v1225 = vpop.f32.mrf.mxu0
  %v1226 = vadd.f32 %v1156, %v1225
  %v1227 = vpop.f32.mrf.mxu0
  %v1228 = vadd.f32 %v1156, %v1227
  %1229 = vdwg.mxu0
  %v1230 = vpack.c.bf16 %v1214, %v1212
  %1231 = vmatpush.bf16.msra.mxu0 0
  %1232 = vmatpush.bf16.msra.mxu0 0
  %1233 = vmatpush.bf16.msra.mxu0 0
  %1234 = vmatpush.bf16.msra.mxu0 0
  %1235 = vmatpush.bf16.msra.mxu0 0
  %1236 = vmatpush.bf16.msra.mxu0 0
  %1237 = vmatpush.bf16.msra.mxu0 0
  %1238 = vmatpush.bf16.msra.mxu0 %v1230
  %1239 = vmatmul.bf16.gmra.mxu0 %v410
  %v1240 = vpop.f32.mrf.mxu0
  %v1241 = vadd.f32 0.0, %v1240
  %v1242 = vpop.f32.mrf.mxu0
  %v1243 = vadd.f32 0.0, %v1242
  %1244 = vmatmul.bf16.gmra.mxu0 %v413
  %v1245 = vpop.f32.mrf.mxu0
  %v1246 = vadd.f32 0.0, %v1245
  %v1247 = vpop.f32.mrf.mxu0
  %v1248 = vadd.f32 0.0, %v1247
  %1249 = vmatmul.bf16.gmra.mxu0 %v416
  %v1250 = vpop.f32.mrf.mxu0
  %v1251 = vadd.f32 0.0, %v1250
  %v1252 = vpop.f32.mrf.mxu0
  %v1253 = vadd.f32 0.0, %v1252
  %1254 = vmatmul.bf16.gmra.mxu0 %v419
  %v1255 = vpop.f32.mrf.mxu0
  %v1256 = vadd.f32 0.0, %v1255
  %v1257 = vpop.f32.mrf.mxu0
  %v1258 = vadd.f32 0.0, %v1257
  %1259 = vdwg.mxu0
  %v1260 = vmul.f32 %v1241, %v257
  %v1261 = vmul.f32 %v1243, %v258
  %v1262 = vmul.f32 %v1246, %v259
  %v1263 = vmul.f32 %v1248, %v260
  %v1264 = vmul.f32 %v1251, %v261
  %v1265 = vmul.f32 %v1253, %v262
  %v1266 = vmul.f32 %v1256, %v263
  %v1267 = vmul.f32 %v1258, %v264
  %v1268 = vpack.c.bf16 %v1261, %v1260
  %v1269 = vpack.c.bf16 %v1263, %v1262
  %v1270 = vpack.c.bf16 %v1265, %v1264
  %v1271 = vpack.c.bf16 %v1267, %v1266
  %1273 = vrot.lane.b32.xlu0 %v1230, 64
  %v1274 = vpop.permute.xlu0 %1273
  %v1276 = vsel %vm181, %v1268, 0
  %v1279 = vsel %vm181, %v1269, 0
  %v1282 = vsel %vm181, %v1270, 0
  %v1285 = vsel %vm181, %v1271, 0
  %v1288 = vsel %vm181, %v1274, 0
  %1290 = vmatpush.bf16.xpose.msra.mxu0 0
  %1291 = vmatpush.bf16.xpose.msra.mxu0 0
  %1292 = vmatpush.bf16.xpose.msra.mxu0 0
  %1293 = vmatpush.bf16.xpose.msra.mxu0 0
  %1294 = vmatpush.bf16.xpose.msra.mxu0 0
  %1295 = vmatpush.bf16.xpose.msra.mxu0 0
  %1296 = vmatpush.bf16.xpose.msra.mxu0 0
  %1297 = vmatpush.bf16.xpose.msra.mxu0 %v1288
  %1298 = vmatmul.bf16.gmra.mxu0 %v1276
  %v1299 = vpop.f32.mrf.mxu0
  %v1300 = vadd.f32 %v293, %v1299
  %v1301 = vpop.f32.mrf.mxu0
  %v1302 = vadd.f32 %v294, %v1301
  %1303 = vmatmul.bf16.gmra.mxu0 %v1279
  %v1304 = vpop.f32.mrf.mxu0
  %v1305 = vadd.f32 %v295, %v1304
  %v1306 = vpop.f32.mrf.mxu0
  %v1307 = vadd.f32 %v296, %v1306
  %1308 = vmatmul.bf16.gmra.mxu0 %v1282
  %v1309 = vpop.f32.mrf.mxu0
  %v1310 = vadd.f32 %v297, %v1309
  %v1311 = vpop.f32.mrf.mxu0
  %v1312 = vadd.f32 %v298, %v1311
  %1313 = vmatmul.bf16.gmra.mxu0 %v1285
  %v1314 = vpop.f32.mrf.mxu0
  %v1315 = vadd.f32 %v299, %v1314
  %v1316 = vpop.f32.mrf.mxu0
  %v1317 = vadd.f32 %v300, %v1316
  %1318 = vdwg.mxu0
  %v1319 = vsel %vm408, %v1300, -inf
  %1320 = vmax.xlane.f32.xlu0 %v1319
  %v1321 = vpop.xlane.xlu0 %1320
  %v1322 = vsel %vm408, %v1302, -inf
  %1323 = vmax.xlane.f32.xlu0 %v1322
  %v1324 = vpop.xlane.xlu0 %1323
  %v1325 = vsel %vm408, %v1305, -inf
  %1326 = vmax.xlane.f32.xlu0 %v1325
  %v1327 = vpop.xlane.xlu0 %1326
  %v1328 = vsel %vm408, %v1307, -inf
  %1329 = vmax.xlane.f32.xlu0 %v1328
  %v1330 = vpop.xlane.xlu0 %1329
  %v1331 = vsel %vm408, %v1310, -inf
  %1332 = vmax.xlane.f32.xlu0 %v1331
  %v1333 = vpop.xlane.xlu0 %1332
  %v1334 = vsel %vm408, %v1312, -inf
  %1335 = vmax.xlane.f32.xlu0 %v1334
  %v1336 = vpop.xlane.xlu0 %1335
  %v1337 = vsel %vm408, %v1315, -inf
  %1338 = vmax.xlane.f32.xlu0 %v1337
  %v1339 = vpop.xlane.xlu0 %1338
  %v1340 = vsel %vm408, %v1317, -inf
  %1341 = vmax.xlane.f32.xlu0 %v1340
  %v1342 = vpop.xlane.xlu0 %1341
  %v1343 = vsub.f32 %v1300, %v1321
  %v1344 = vsub.f32 %v1302, %v1324
  %v1345 = vsub.f32 %v1305, %v1327
  %v1346 = vsub.f32 %v1307, %v1330
  %v1347 = vsub.f32 %v1310, %v1333
  %v1348 = vsub.f32 %v1312, %v1336
  %v1349 = vsub.f32 %v1315, %v1339
  %v1350 = vsub.f32 %v1317, %v1342
  %v1351 = vmul.f32 %v1343, 1.442695
  %v1352 = vpow.pop %v1351
  %v1353 = vmul.f32 %v1344, 1.442695
  %v1354 = vpow.pop %v1353
  %v1355 = vmul.f32 %v1345, 1.442695
  %v1356 = vpow.pop %v1355
  %v1357 = vmul.f32 %v1346, 1.442695
  %v1358 = vpow.pop %v1357
  %v1359 = vmul.f32 %v1347, 1.442695
  %v1360 = vpow.pop %v1359
  %v1361 = vmul.f32 %v1348, 1.442695
  %v1362 = vpow.pop %v1361
  %v1363 = vmul.f32 %v1349, 1.442695
  %v1364 = vpow.pop %v1363
  %v1365 = vmul.f32 %v1350, 1.442695
  %v1366 = vpow.pop %v1365
  %v1367 = vsel %vm408, %v1352, 0.0
  %1368 = vadd.xlane.f32.xlu0 %v1367
  %v1369 = vpop.xlane.xlu0 %1368
  %v1370 = vsel %vm408, %v1354, 0.0
  %1371 = vadd.xlane.f32.xlu0 %v1370
  %v1372 = vpop.xlane.xlu0 %1371
  %v1373 = vsel %vm408, %v1356, 0.0
  %1374 = vadd.xlane.f32.xlu0 %v1373
  %v1375 = vpop.xlane.xlu0 %1374
  %v1376 = vsel %vm408, %v1358, 0.0
  %1377 = vadd.xlane.f32.xlu0 %v1376
  %v1378 = vpop.xlane.xlu0 %1377
  %v1379 = vsel %vm408, %v1360, 0.0
  %1380 = vadd.xlane.f32.xlu0 %v1379
  %v1381 = vpop.xlane.xlu0 %1380
  %v1382 = vsel %vm408, %v1362, 0.0
  %1383 = vadd.xlane.f32.xlu0 %v1382
  %v1384 = vpop.xlane.xlu0 %1383
  %v1385 = vsel %vm408, %v1364, 0.0
  %1386 = vadd.xlane.f32.xlu0 %v1385
  %v1387 = vpop.xlane.xlu0 %1386
  %v1388 = vsel %vm408, %v1366, 0.0
  %1389 = vadd.xlane.f32.xlu0 %v1388
  %v1390 = vpop.xlane.xlu0 %1389
  %v1391 = vrcp.pop %v1369
  %v1392 = vrcp.pop %v1372
  %v1393 = vrcp.pop %v1375
  %v1394 = vrcp.pop %v1378
  %v1395 = vrcp.pop %v1381
  %v1396 = vrcp.pop %v1384
  %v1397 = vrcp.pop %v1387
  %v1398 = vrcp.pop %v1390
  %v1399 = vmul.f32 %v1352, %v1391
  %v1400 = vmul.f32 %v1354, %v1392
  %v1401 = vmul.f32 %v1356, %v1393
  %v1402 = vmul.f32 %v1358, %v1394
  %v1403 = vmul.f32 %v1360, %v1395
  %v1404 = vmul.f32 %v1362, %v1396
  %v1405 = vmul.f32 %v1364, %v1397
  %v1406 = vmul.f32 %v1366, %v1398
  %v1407 = vpack.c.bf16 %v1400, %v1399
  %v1408 = vpack.c.bf16 %v1402, %v1401
  %v1409 = vpack.c.bf16 %v1404, %v1403
  %v1410 = vpack.c.bf16 %v1406, %v1405
  %v1411 = vpack.c.bf16 %v1228, %v1226
  %v1413 = vsel %vm408, %v1407, 0
  %v1416 = vsel %vm408, %v1408, 0
  %v1419 = vsel %vm408, %v1409, 0
  %v1422 = vsel %vm408, %v1410, 0
  %1424 = vmatpush.bf16.msra.mxu0 0
  %1425 = vmatpush.bf16.msra.mxu0 0
  %1426 = vmatpush.bf16.msra.mxu0 0
  %1427 = vmatpush.bf16.msra.mxu0 0
  %1428 = vmatpush.bf16.msra.mxu0 0
  %1429 = vmatpush.bf16.msra.mxu0 0
  %1430 = vmatpush.bf16.msra.mxu0 0
  %1431 = vmatpush.bf16.msra.mxu0 %v1411
  %1432 = vmatmul.bf16.gmra.mxu0 %v1413
  %v1433 = vpop.f32.mrf.mxu0
  %v1434 = vadd.f32 0.0, %v1433
  %v1435 = vpop.f32.mrf.mxu0
  %v1436 = vadd.f32 0.0, %v1435
  %1437 = vmatmul.bf16.gmra.mxu0 %v1416
  %v1438 = vpop.f32.mrf.mxu0
  %v1439 = vadd.f32 0.0, %v1438
  %v1440 = vpop.f32.mrf.mxu0
  %v1441 = vadd.f32 0.0, %v1440
  %1442 = vmatmul.bf16.gmra.mxu0 %v1419
  %v1443 = vpop.f32.mrf.mxu0
  %v1444 = vadd.f32 0.0, %v1443
  %v1445 = vpop.f32.mrf.mxu0
  %v1446 = vadd.f32 0.0, %v1445
  %1447 = vmatmul.bf16.gmra.mxu0 %v1422
  %v1448 = vpop.f32.mrf.mxu0
  %v1449 = vadd.f32 0.0, %v1448
  %v1450 = vpop.f32.mrf.mxu0
  %v1451 = vadd.f32 0.0, %v1450
  %1452 = vdwg.mxu0
  %v1453 = vmul.f32 %v1434, %v257
  %v1454 = vmul.f32 %v1436, %v258
  %v1455 = vmul.f32 %v1439, %v259
  %v1456 = vmul.f32 %v1441, %v260
  %v1457 = vmul.f32 %v1444, %v261
  %v1458 = vmul.f32 %v1446, %v262
  %v1459 = vmul.f32 %v1449, %v263
  %v1460 = vmul.f32 %v1451, %v264
  %v1461 = vpack.c.bf16 %v1454, %v1453
  %v1462 = vpack.c.bf16 %v1456, %v1455
  %v1463 = vpack.c.bf16 %v1458, %v1457
  %v1464 = vpack.c.bf16 %v1460, %v1459
  %1465 = vmatpush.bf16.msra.mxu0 0
  %1466 = vmatpush.bf16.msra.mxu0 0
  %1467 = vmatpush.bf16.msra.mxu0 0
  %1468 = vmatpush.bf16.msra.mxu0 0
  %1469 = vmatpush.bf16.msra.mxu0 %v1464
  %1470 = vmatpush.bf16.msra.mxu0 %v1463
  %1471 = vmatpush.bf16.msra.mxu0 %v1462
  %1472 = vmatpush.bf16.msra.mxu0 %v1461
  %1473 = vmatmul.bf16.gmra.mxu0 %v661
  %v1474 = vpop.f32.mrf.mxu0
  %v1475 = vadd.f32 0.0, %v1474
  %v1476 = vpop.f32.mrf.mxu0
  %v1477 = vadd.f32 0.0, %v1476
  %1478 = vdwg.mxu0
  %v1479 = vpack.c.bf16 %v1477, %v1475
  %s1480 = scalar_lea.vmem %s12, 32
  %v1481 = vld [vmem:[%s1480] sm:$0xf]
  %v1482 = vld [vmem:[%s1480 + $0x4] sm:$0xf]
  %v1483 = vld [vmem:[%s1480 + $0x8] sm:$0xf]
  %v1484 = vld [vmem:[%s1480 + $0xc] sm:$0xf]
  %v1485 = vld [vmem:[%s1480 + $0x10] sm:$0xf]
  %v1486 = vld [vmem:[%s1480 + $0x14] sm:$0xf]
  %v1487 = vld [vmem:[%s1480 + $0x18] sm:$0xf]
  %v1488 = vld [vmem:[%s1480 + $0x1c] sm:$0xf]
  %s1489 = scalar_lea.vmem %s13, 1
  %v1490 = vld [vmem:[%s1489] sm:$0x1]
  %v1492 = vperm.slane %v1490, 0
  %v1502 = vunpack.c.l.b16 %v1481
  %v1503 = vunpack.c.l.b16 %v1482
  %v1504 = vunpack.c.l.b16 %v1483
  %v1505 = vunpack.c.l.b16 %v1484
  %v1506 = vunpack.c.l.b16 %v1485
  %v1507 = vunpack.c.l.b16 %v1486
  %v1508 = vunpack.c.l.b16 %v1487
  %v1509 = vunpack.c.l.b16 %v1488
  %v1510 = vpack.c.b16 %v1503, %v1502
  %v1511 = vpack.c.b16 %v1505, %v1504
  %v1512 = vpack.c.b16 %v1507, %v1506
  %v1513 = vpack.c.b16 %v1509, %v1508
  %v1519 = vsel %vm181, %v1479, 0
  %1521 = vmatpush.bf16.msra.mxu0 0
  %1522 = vmatpush.bf16.msra.mxu0 0
  %1523 = vmatpush.bf16.msra.mxu0 0
  %1524 = vmatpush.bf16.msra.mxu0 0
  %1525 = vmatpush.bf16.msra.mxu0 %v1513
  %1526 = vmatpush.bf16.msra.mxu0 %v1512
  %1527 = vmatpush.bf16.msra.mxu0 %v1511
  %1528 = vmatpush.bf16.msra.mxu0 %v1510
  %1529 = vmatmul.bf16.gmra.mxu0 %v1519
  %v1530 = vpop.f32.mrf.mxu0
  %v1531 = vadd.f32 %v1492, %v1530
  %v1532 = vpop.f32.mrf.mxu0
  %v1533 = vadd.f32 %v1492, %v1532
  %1534 = vdwg.mxu0
  %v1535 = vadd.f32 %v1140, %v1531
  %v1536 = vadd.f32 %v1141, %v1533
  %s1537 = scalar_lea.vmem %s14, 4
  %v1538 = vld [vmem:[%s1537] sm:$0x1]
  %s1539 = scalar_lea.vmem %s14, 5
  %v1540 = vld [vmem:[%s1539] sm:$0x1]
  %v1541 = vsel %vm181, %v1535, 0.0
  %1542 = vadd.xlane.f32.xlu0 %v1541
  %v1543 = vpop.xlane.xlu0 %1542
  %v1544 = vsel %vm181, %v1536, 0.0
  %1545 = vadd.xlane.f32.xlu0 %v1544
  %v1546 = vpop.xlane.xlu0 %1545
  %v1547 = vmul.f32 %v1543, %v194
  %v1548 = vmul.f32 %v1546, %v194
  %v1549 = vmul.f32 %v1535, %v1535
  %v1550 = vmul.f32 %v1536, %v1536
  %v1551 = vsel %vm181, %v1549, 0.0
  %1552 = vadd.xlane.f32.xlu0 %v1551
  %v1553 = vpop.xlane.xlu0 %1552
  %v1554 = vsel %vm181, %v1550, 0.0
  %1555 = vadd.xlane.f32.xlu0 %v1554
  %v1556 = vpop.xlane.xlu0 %1555
  %v1557 = vmul.f32 %v1553, %v194
  %v1558 = vmul.f32 %v1556, %v194
  %v1559 = vmul.f32 %v1547, %v1547
  %v1560 = vmul.f32 %v1548, %v1548
  %v1561 = vsub.f32 %v1557, %v1559
  %v1562 = vsub.f32 %v1558, %v1560
  %v1563 = vsub.f32 %v1535, %v1547
  %v1564 = vsub.f32 %v1536, %v1548
  %v1565 = vadd.f32 %v1561, 1e-12
  %v1566 = vadd.f32 %v1562, 1e-12
  %v1567 = vrsqrt.pop %v1565
  %v1568 = vmul.f32 %v1567, %v1565
  %v1569 = vmul.f32 %v1568, %v1567
  %v1570 = vmul.f32 0.5, %v1569
  %v1571 = vsub.f32 1.5, %v1570
  %v1572 = vmul.f32 %v1567, %v1571
  %vm1573 = vweird.f32 %v1565
  %vm1574 = vweird.f32 %v1567
  %vm1575 = vmor %vm1573, %vm1574
  %v1576 = vsel %vm1575, %v1567, %v1572
  %v1577 = vrsqrt.pop %v1566
  %v1578 = vmul.f32 %v1577, %v1566
  %v1579 = vmul.f32 %v1578, %v1577
  %v1580 = vmul.f32 0.5, %v1579
  %v1581 = vsub.f32 1.5, %v1580
  %v1582 = vmul.f32 %v1577, %v1581
  %vm1583 = vweird.f32 %v1566
  %vm1584 = vweird.f32 %v1577
  %vm1585 = vmor %vm1583, %vm1584
  %v1586 = vsel %vm1585, %v1577, %v1582
  %v1587 = vmul.f32 %v1563, %v1576
  %v1588 = vmul.f32 %v1564, %v1586
  %v1590 = vperm.slane %v1538, 0
  %v1592 = vmul.f32 %v1587, %v1590
  %v1593 = vmul.f32 %v1588, %v1590
  %v1595 = vperm.slane %v1540, 0
  %v1597 = vadd.f32 %v1592, %v1595
  %v1598 = vadd.f32 %v1593, %v1595
  %v1599 = vpack.c.bf16 %v1598, %v1597
  %s1600 = scalar_lea.vmem %s15, 64
  %v1601 = vld [vmem:[%s1600] sm:$0xff]
  %v1602 = vld [vmem:[%s1600 + $0x8] sm:$0xff]
  %v1603 = vld [vmem:[%s1600 + $0x10] sm:$0xff]
  %v1604 = vld [vmem:[%s1600 + $0x18] sm:$0xff]
  %v1605 = vld [vmem:[%s1600 + $0x20] sm:$0xff]
  %v1606 = vld [vmem:[%s1600 + $0x28] sm:$0xff]
  %v1607 = vld [vmem:[%s1600 + $0x30] sm:$0xff]
  %v1608 = vld [vmem:[%s1600 + $0x38] sm:$0xff]
  %s1609 = scalar_lea.vmem %s16, 2
  %v1610 = vld [vmem:[%s1609] sm:$0x3]
  %v1612 = vperm.slane %v1610, 0
  %v1613 = vperm.slane %v1610, 1
  %v1624 = vunpack.c.l.b16 %v1601
  %v1625 = vunpack.c.h.b16 %v1601
  %v1626 = vunpack.c.l.b16 %v1602
  %v1627 = vunpack.c.h.b16 %v1602
  %v1628 = vunpack.c.l.b16 %v1603
  %v1629 = vunpack.c.h.b16 %v1603
  %v1630 = vunpack.c.l.b16 %v1604
  %v1631 = vunpack.c.h.b16 %v1604
  %v1632 = vunpack.c.l.b16 %v1605
  %v1633 = vunpack.c.h.b16 %v1605
  %v1634 = vunpack.c.l.b16 %v1606
  %v1635 = vunpack.c.h.b16 %v1606
  %v1636 = vunpack.c.l.b16 %v1607
  %v1637 = vunpack.c.h.b16 %v1607
  %v1638 = vunpack.c.l.b16 %v1608
  %v1639 = vunpack.c.h.b16 %v1608
  %v1640 = vpack.c.b16 %v1626, %v1624
  %v1641 = vpack.c.b16 %v1627, %v1625
  %v1642 = vpack.c.b16 %v1630, %v1628
  %v1643 = vpack.c.b16 %v1631, %v1629
  %v1644 = vpack.c.b16 %v1634, %v1632
  %v1645 = vpack.c.b16 %v1635, %v1633
  %v1646 = vpack.c.b16 %v1638, %v1636
  %v1647 = vpack.c.b16 %v1639, %v1637
  %v1657 = vsel %vm181, %v1599, 0
  %1659 = vmatpush.bf16.msra.mxu0 0
  %1660 = vmatpush.bf16.msra.mxu0 0
  %1661 = vmatpush.bf16.msra.mxu0 0
  %1662 = vmatpush.bf16.msra.mxu0 0
  %1663 = vmatpush.bf16.msra.mxu0 %v1646
  %1664 = vmatpush.bf16.msra.mxu0 %v1644
  %1665 = vmatpush.bf16.msra.mxu0 %v1642
  %1666 = vmatpush.bf16.msra.mxu0 %v1640
  %1667 = vmatmul.bf16.gmra.mxu0 %v1657
  %v1668 = vpop.f32.mrf.mxu0
  %v1669 = vadd.f32 %v1612, %v1668
  %v1670 = vpop.f32.mrf.mxu0
  %v1671 = vadd.f32 %v1612, %v1670
  %1672 = vdwg.mxu0
  %1673 = vmatpush.bf16.msra.mxu0 0
  %1674 = vmatpush.bf16.msra.mxu0 0
  %1675 = vmatpush.bf16.msra.mxu0 0
  %1676 = vmatpush.bf16.msra.mxu0 0
  %1677 = vmatpush.bf16.msra.mxu0 %v1647
  %1678 = vmatpush.bf16.msra.mxu0 %v1645
  %1679 = vmatpush.bf16.msra.mxu0 %v1643
  %1680 = vmatpush.bf16.msra.mxu0 %v1641
  %1681 = vmatmul.bf16.gmra.mxu0 %v1657
  %v1682 = vpop.f32.mrf.mxu0
  %v1683 = vadd.f32 %v1613, %v1682
  %v1684 = vpop.f32.mrf.mxu0
  %v1685 = vadd.f32 %v1613, %v1684
  %1686 = vdwg.mxu0
  %v1687 = vmul.f32 %v1669, %v1669
  %v1688 = vmul.f32 %v1683, %v1683
  %v1689 = vmul.f32 %v1671, %v1671
  %v1690 = vmul.f32 %v1685, %v1685
  %v1691 = vmul.f32 %v1669, %v1687
  %v1692 = vmul.f32 %v1683, %v1688
  %v1693 = vmul.f32 %v1671, %v1689
  %v1694 = vmul.f32 %v1685, %v1690
  %v1695 = vmul.f32 %v1691, 0.044715
  %v1696 = vmul.f32 %v1692, 0.044715
  %v1697 = vmul.f32 %v1693, 0.044715
  %v1698 = vmul.f32 %v1694, 0.044715
  %v1699 = vadd.f32 %v1669, %v1695
  %v1700 = vadd.f32 %v1683, %v1696
  %v1701 = vadd.f32 %v1671, %v1697
  %v1702 = vadd.f32 %v1685, %v1698
  %v1703 = vmul.f32 %v1699, 0.7978846
  %v1704 = vmul.f32 %v1700, 0.7978846
  %v1705 = vmul.f32 %v1701, 0.7978846
  %v1706 = vmul.f32 %v1702, 0.7978846
  %v1707 = vtanh.pop %v1703
  %v1708 = vtanh.pop %v1704
  %v1709 = vtanh.pop %v1705
  %v1710 = vtanh.pop %v1706
  %v1711 = vadd.f32 %v1707, 1.0
  %v1712 = vadd.f32 %v1708, 1.0
  %v1713 = vadd.f32 %v1709, 1.0
  %v1714 = vadd.f32 %v1710, 1.0
  %v1715 = vmul.f32 %v1711, 0.5
  %v1716 = vmul.f32 %v1712, 0.5
  %v1717 = vmul.f32 %v1713, 0.5
  %v1718 = vmul.f32 %v1714, 0.5
  %v1719 = vmul.f32 %v1669, %v1715
  %v1720 = vmul.f32 %v1683, %v1716
  %v1721 = vmul.f32 %v1671, %v1717
  %v1722 = vmul.f32 %v1685, %v1718
  %v1723 = vpack.c.bf16 %v1721, %v1719
  %v1724 = vpack.c.bf16 %v1722, %v1720
  %s1725 = scalar_lea.vmem %s17, 128
  %v1726 = vld [vmem:[%s1725] sm:$0xf]
  %v1727 = vld [vmem:[%s1725 + $0x4] sm:$0xf]
  %v1728 = vld [vmem:[%s1725 + $0x8] sm:$0xf]
  %v1729 = vld [vmem:[%s1725 + $0xc] sm:$0xf]
  %v1730 = vld [vmem:[%s1725 + $0x10] sm:$0xf]
  %v1731 = vld [vmem:[%s1725 + $0x14] sm:$0xf]
  %v1732 = vld [vmem:[%s1725 + $0x18] sm:$0xf]
  %v1733 = vld [vmem:[%s1725 + $0x1c] sm:$0xf]
  %v1734 = vld [vmem:[%s1725 + $0x20] sm:$0xf]
  %v1735 = vld [vmem:[%s1725 + $0x24] sm:$0xf]
  %v1736 = vld [vmem:[%s1725 + $0x28] sm:$0xf]
  %v1737 = vld [vmem:[%s1725 + $0x2c] sm:$0xf]
  %v1738 = vld [vmem:[%s1725 + $0x30] sm:$0xf]
  %v1739 = vld [vmem:[%s1725 + $0x34] sm:$0xf]
  %v1740 = vld [vmem:[%s1725 + $0x38] sm:$0xf]
  %v1741 = vld [vmem:[%s1725 + $0x3c] sm:$0xf]
  %v1742 = vld [vmem:[%s1725 + $0x40] sm:$0xf]
  %v1743 = vld [vmem:[%s1725 + $0x44] sm:$0xf]
  %v1744 = vld [vmem:[%s1725 + $0x48] sm:$0xf]
  %v1745 = vld [vmem:[%s1725 + $0x4c] sm:$0xf]
  %v1746 = vld [vmem:[%s1725 + $0x50] sm:$0xf]
  %v1747 = vld [vmem:[%s1725 + $0x54] sm:$0xf]
  %v1748 = vld [vmem:[%s1725 + $0x58] sm:$0xf]
  %v1749 = vld [vmem:[%s1725 + $0x5c] sm:$0xf]
  %v1750 = vld [vmem:[%s1725 + $0x60] sm:$0xf]
  %v1751 = vld [vmem:[%s1725 + $0x64] sm:$0xf]
  %v1752 = vld [vmem:[%s1725 + $0x68] sm:$0xf]
  %v1753 = vld [vmem:[%s1725 + $0x6c] sm:$0xf]
  %v1754 = vld [vmem:[%s1725 + $0x70] sm:$0xf]
  %v1755 = vld [vmem:[%s1725 + $0x74] sm:$0xf]
  %v1756 = vld [vmem:[%s1725 + $0x78] sm:$0xf]
  %v1757 = vld [vmem:[%s1725 + $0x7c] sm:$0xf]
  %s1758 = scalar_lea.vmem %s18, 1
  %v1759 = vld [vmem:[%s1758] sm:$0x1]
  %v1761 = vperm.slane %v1759, 0
  %v1795 = vunpack.c.l.b16 %v1726
  %v1796 = vunpack.c.l.b16 %v1727
  %v1797 = vunpack.c.l.b16 %v1728
  %v1798 = vunpack.c.l.b16 %v1729
  %v1799 = vunpack.c.l.b16 %v1730
  %v1800 = vunpack.c.l.b16 %v1731
  %v1801 = vunpack.c.l.b16 %v1732
  %v1802 = vunpack.c.l.b16 %v1733
  %v1803 = vunpack.c.l.b16 %v1734
  %v1804 = vunpack.c.l.b16 %v1735
  %v1805 = vunpack.c.l.b16 %v1736
  %v1806 = vunpack.c.l.b16 %v1737
  %v1807 = vunpack.c.l.b16 %v1738
  %v1808 = vunpack.c.l.b16 %v1739
  %v1809 = vunpack.c.l.b16 %v1740
  %v1810 = vunpack.c.l.b16 %v1741
  %v1811 = vunpack.c.l.b16 %v1742
  %v1812 = vunpack.c.l.b16 %v1743
  %v1813 = vunpack.c.l.b16 %v1744
  %v1814 = vunpack.c.l.b16 %v1745
  %v1815 = vunpack.c.l.b16 %v1746
  %v1816 = vunpack.c.l.b16 %v1747
  %v1817 = vunpack.c.l.b16 %v1748
  %v1818 = vunpack.c.l.b16 %v1749
  %v1819 = vunpack.c.l.b16 %v1750
  %v1820 = vunpack.c.l.b16 %v1751
  %v1821 = vunpack.c.l.b16 %v1752
  %v1822 = vunpack.c.l.b16 %v1753
  %v1823 = vunpack.c.l.b16 %v1754
  %v1824 = vunpack.c.l.b16 %v1755
  %v1825 = vunpack.c.l.b16 %v1756
  %v1826 = vunpack.c.l.b16 %v1757
  %v1827 = vpack.c.b16 %v1796, %v1795
  %v1828 = vpack.c.b16 %v1798, %v1797
  %v1829 = vpack.c.b16 %v1800, %v1799
  %v1830 = vpack.c.b16 %v1802, %v1801
  %v1831 = vpack.c.b16 %v1804, %v1803
  %v1832 = vpack.c.b16 %v1806, %v1805
  %v1833 = vpack.c.b16 %v1808, %v1807
  %v1834 = vpack.c.b16 %v1810, %v1809
  %v1835 = vpack.c.b16 %v1812, %v1811
  %v1836 = vpack.c.b16 %v1814, %v1813
  %v1837 = vpack.c.b16 %v1816, %v1815
  %v1838 = vpack.c.b16 %v1818, %v1817
  %v1839 = vpack.c.b16 %v1820, %v1819
  %v1840 = vpack.c.b16 %v1822, %v1821
  %v1841 = vpack.c.b16 %v1824, %v1823
  %v1842 = vpack.c.b16 %v1826, %v1825
  %1859 = vmatpush.bf16.msra.mxu0 %v1834
  %1860 = vmatpush.bf16.msra.mxu0 %v1833
  %1861 = vmatpush.bf16.msra.mxu0 %v1832
  %1862 = vmatpush.bf16.msra.mxu0 %v1831
  %1863 = vmatpush.bf16.msra.mxu0 %v1830
  %1864 = vmatpush.bf16.msra.mxu0 %v1829
  %1865 = vmatpush.bf16.msra.mxu0 %v1828
  %1866 = vmatpush.bf16.msra.mxu0 %v1827
  %1867 = vmatmul.bf16.gmra.mxu0 %v1723
  %v1868 = vpop.f32.mrf.mxu0
  %v1869 = vadd.f32 %v1761, %v1868
  %v1870 = vpop.f32.mrf.mxu0
  %v1871 = vadd.f32 %v1761, %v1870
  %1872 = vdwg.mxu0
  %1873 = vmatpush.bf16.msra.mxu0 %v1842
  %1874 = vmatpush.bf16.msra.mxu0 %v1841
  %1875 = vmatpush.bf16.msra.mxu0 %v1840
  %1876 = vmatpush.bf16.msra.mxu0 %v1839
  %1877 = vmatpush.bf16.msra.mxu0 %v1838
  %1878 = vmatpush.bf16.msra.mxu0 %v1837
  %1879 = vmatpush.bf16.msra.mxu0 %v1836
  %1880 = vmatpush.bf16.msra.mxu0 %v1835
  %1881 = vmatmul.bf16.gmra.mxu0 %v1724
  %v1882 = vpop.f32.mrf.mxu0
  %v1883 = vadd.f32 %v1869, %v1882
  %v1884 = vpop.f32.mrf.mxu0
  %v1885 = vadd.f32 %v1871, %v1884
  %1886 = vdwg.mxu0
  %v1887 = vadd.f32 %v1597, %v1883
  %v1888 = vadd.f32 %v1598, %v1885
  %s1889 = scalar_lea.vmem %s14, 6
  %v1890 = vld [vmem:[%s1889] sm:$0x1]
  %s1891 = scalar_lea.vmem %s14, 7
  %v1892 = vld [vmem:[%s1891] sm:$0x1]
  %v1893 = vsel %vm181, %v1887, 0.0
  %1894 = vadd.xlane.f32.xlu0 %v1893
  %v1895 = vpop.xlane.xlu0 %1894
  %v1896 = vsel %vm181, %v1888, 0.0
  %1897 = vadd.xlane.f32.xlu0 %v1896
  %v1898 = vpop.xlane.xlu0 %1897
  %v1899 = vmul.f32 %v1895, %v194
  %v1900 = vmul.f32 %v1898, %v194
  %v1901 = vmul.f32 %v1887, %v1887
  %v1902 = vmul.f32 %v1888, %v1888
  %v1903 = vsel %vm181, %v1901, 0.0
  %1904 = vadd.xlane.f32.xlu0 %v1903
  %v1905 = vpop.xlane.xlu0 %1904
  %v1906 = vsel %vm181, %v1902, 0.0
  %1907 = vadd.xlane.f32.xlu0 %v1906
  %v1908 = vpop.xlane.xlu0 %1907
  %v1909 = vmul.f32 %v1905, %v194
  %v1910 = vmul.f32 %v1908, %v194
  %v1911 = vmul.f32 %v1899, %v1899
  %v1912 = vmul.f32 %v1900, %v1900
  %v1913 = vsub.f32 %v1909, %v1911
  %v1914 = vsub.f32 %v1910, %v1912
  %v1915 = vsub.f32 %v1887, %v1899
  %v1916 = vsub.f32 %v1888, %v1900
  %v1917 = vadd.f32 %v1913, 1e-12
  %v1918 = vadd.f32 %v1914, 1e-12
  %v1919 = vrsqrt.pop %v1917
  %v1920 = vmul.f32 %v1919, %v1917
  %v1921 = vmul.f32 %v1920, %v1919
  %v1922 = vmul.f32 0.5, %v1921
  %v1923 = vsub.f32 1.5, %v1922
  %v1924 = vmul.f32 %v1919, %v1923
  %vm1925 = vweird.f32 %v1917
  %vm1926 = vweird.f32 %v1919
  %vm1927 = vmor %vm1925, %vm1926
  %v1928 = vsel %vm1927, %v1919, %v1924
  %v1929 = vrsqrt.pop %v1918
  %v1930 = vmul.f32 %v1929, %v1918
  %v1931 = vmul.f32 %v1930, %v1929
  %v1932 = vmul.f32 0.5, %v1931
  %v1933 = vsub.f32 1.5, %v1932
  %v1934 = vmul.f32 %v1929, %v1933
  %vm1935 = vweird.f32 %v1918
  %vm1936 = vweird.f32 %v1929
  %vm1937 = vmor %vm1935, %vm1936
  %v1938 = vsel %vm1937, %v1929, %v1934
  %v1939 = vmul.f32 %v1915, %v1928
  %v1940 = vmul.f32 %v1916, %v1938
  %v1942 = vperm.slane %v1890, 0
  %v1944 = vmul.f32 %v1939, %v1942
  %v1945 = vmul.f32 %v1940, %v1942
  %v1947 = vperm.slane %v1892, 0
  %v1949 = vadd.f32 %v1944, %v1947
  %v1950 = vadd.f32 %v1945, %v1947
  %v1951 = vld [vmem:[%s4] sm:$0xf]
  %v1952 = vpack.c.bf16 %v1950, %v1949
  %v1954 = vsel %vm408, %v1951, 0
  %1956 = vmatpush.bf16.msra.mxu0 0
  %1957 = vmatpush.bf16.msra.mxu0 0
  %1958 = vmatpush.bf16.msra.mxu0 0
  %1959 = vmatpush.bf16.msra.mxu0 0
  %1960 = vmatpush.bf16.msra.mxu0 0
  %1961 = vmatpush.bf16.msra.mxu0 0
  %1962 = vmatpush.bf16.msra.mxu0 0
  %1963 = vmatpush.bf16.msra.mxu0 %v1952
  %1964 = vmatmul.bf16.gmra.mxu0 %v1954
  %v1965 = vpop.f32.mrf.mxu0
  %v1966 = vadd.f32 0.0, %v1965
  %v1967 = vpop.f32.mrf.mxu0
  %1968 = vdwg.mxu0
  %v1969 = vpack.c.bf16 %v1966, %v1966
  %v1970 = vld [vmem:[%s19] sm:$0xf]
  %v1971 = vld [vmem:[%s19 + $0x4] sm:$0xf]
  %v1972 = vld [vmem:[%s19 + $0x8] sm:$0xf]
  %v1973 = vld [vmem:[%s19 + $0xc] sm:$0xf]
  %v1974 = vld [vmem:[%s19 + $0x10] sm:$0xf]
  %v1975 = vld [vmem:[%s19 + $0x14] sm:$0xf]
  %v1976 = vld [vmem:[%s19 + $0x18] sm:$0xf]
  %v1977 = vld [vmem:[%s19 + $0x1c] sm:$0xf]
  %v1978 = vld [vmem:[%s20] sm:$0x1]
  %v1980 = vperm.slane %v1978, 0
  %v1990 = vunpack.c.l.b16 %v1970
  %v1991 = vunpack.c.l.b16 %v1971
  %v1992 = vunpack.c.l.b16 %v1972
  %v1993 = vunpack.c.l.b16 %v1973
  %v1994 = vunpack.c.l.b16 %v1974
  %v1995 = vunpack.c.l.b16 %v1975
  %v1996 = vunpack.c.l.b16 %v1976
  %v1997 = vunpack.c.l.b16 %v1977
  %v1998 = vpack.c.b16 %v1991, %v1990
  %v1999 = vpack.c.b16 %v1993, %v1992
  %v2000 = vpack.c.b16 %v1995, %v1994
  %v2001 = vpack.c.b16 %v1997, %v1996
  %v2007 = vsel %vm181, %v1969, 0
  %2009 = vmatpush.bf16.msra.mxu0 0
  %2010 = vmatpush.bf16.msra.mxu0 0
  %2011 = vmatpush.bf16.msra.mxu0 0
  %2012 = vmatpush.bf16.msra.mxu0 0
  %2013 = vmatpush.bf16.msra.mxu0 %v2001
  %2014 = vmatpush.bf16.msra.mxu0 %v2000
  %2015 = vmatpush.bf16.msra.mxu0 %v1999
  %2016 = vmatpush.bf16.msra.mxu0 %v1998
  %2017 = vmatmul.bf16.gmra.mxu0 %v2007
  %v2018 = vpop.f32.mrf.mxu0
  %v2019 = vadd.f32 %v1980, %v2018
  %v2020 = vpop.f32.mrf.mxu0
  %2021 = vdwg.mxu0
  %v2022 = vmax.f32 %v2019, 0.0
  %v2023 = vpack.c.bf16 %v2022, %v2022
  %v2024 = vld [vmem:[%s21] sm:$0xf]
  %v2025 = vld [vmem:[%s21 + $0x4] sm:$0xf]
  %v2026 = vld [vmem:[%s21 + $0x8] sm:$0xf]
  %v2027 = vld [vmem:[%s21 + $0xc] sm:$0xf]
  %v2028 = vld [vmem:[%s22] sm:$0x1]
  %v2030 = vperm.slane %v2028, 0
  %v2036 = vunpack.c.l.b16 %v2024
  %v2037 = vunpack.c.l.b16 %v2025
  %v2038 = vunpack.c.l.b16 %v2026
  %v2039 = vunpack.c.l.b16 %v2027
  %v2040 = vpack.c.b16 %v2037, %v2036
  %v2041 = vpack.c.b16 %v2039, %v2038
  %vm2044 = vcmask 261120
  %v2046 = vsel %vm2044, %v2023, 0
  %2048 = vmatpush.bf16.msra.mxu0 0
  %2049 = vmatpush.bf16.msra.mxu0 0
  %2050 = vmatpush.bf16.msra.mxu0 0
  %2051 = vmatpush.bf16.msra.mxu0 0
  %2052 = vmatpush.bf16.msra.mxu0 0
  %2053 = vmatpush.bf16.msra.mxu0 0
  %2054 = vmatpush.bf16.msra.mxu0 %v2041
  %2055 = vmatpush.bf16.msra.mxu0 %v2040
  %2056 = vmatmul.bf16.gmra.mxu0 %v2046
  %v2057 = vpop.f32.mrf.mxu0
  %v2058 = vadd.f32 %v2030, %v2057
  %v2059 = vpop.f32.mrf.mxu0
  %2060 = vdwg.mxu0
  %v2061 = vmax.f32 %v2058, 0.0
  %v2062 = vpack.c.bf16 %v2061, %v2061
  %v2063 = vld [vmem:[%s23] sm:$0xf]
  %v2064 = vld [vmem:[%s23 + $0x4] sm:$0xf]
  %v2065 = vld [vmem:[%s24] sm:$0x1]
  %v2067 = vperm.slane %v2065, 0
  %v2071 = vunpack.c.l.b16 %v2063
  %v2072 = vunpack.c.l.b16 %v2064
  %v2073 = vpack.c.b16 %v2072, %v2071
  %v2076 = vsel %vm408, %v2062, 0
  %2078 = vmatpush.bf16.msra.mxu0 0
  %2079 = vmatpush.bf16.msra.mxu0 0
  %2080 = vmatpush.bf16.msra.mxu0 0
  %2081 = vmatpush.bf16.msra.mxu0 0
  %2082 = vmatpush.bf16.msra.mxu0 0
  %2083 = vmatpush.bf16.msra.mxu0 0
  %2084 = vmatpush.bf16.msra.mxu0 0
  %2085 = vmatpush.bf16.msra.mxu0 %v2073
  %2086 = vmatmul.bf16.gmra.mxu0 %v2076
  %v2087 = vpop.f32.mrf.mxu0
  %v2088 = vadd.f32 %v2067, %v2087
  %v2089 = vpop.f32.mrf.mxu0
  %2090 = vdwg.mxu0
  %2091 = vst [vmem:[%s25] sm:$0xff] %v2088
  // Predicated region
  $region102: #{forward.1} parent=0 // pred_check
    _
  $region103: #{forward.1} parent=0 // pred_check_branch
    %2093 = sbr.rel (0) target = $region105
  $region104: #{forward.1} parent=0 // pred_region
    _
  $region105: #{forward.1} parent=0 // pred_fallthru
    _
  // Predicated region
  $region106: #{forward.1} parent=0 // pred_check
    _
  $region107: #{forward.1} parent=0 // pred_check_branch
    %2095 = sbr.rel (0) target = $region109
  $region108: #{forward.1} parent=0 // pred_region
    _
  $region109: #{forward.1} parent=0 // pred_fallthru
    _

</llo_original>
